<compile_context>
chip_gen: v6e
topology: v6e:2x2x1
jax: 0.10.0
libtpu: 0.0.40
codegen_flags: <defaults>
</compile_context>

<pallas_src>
import functools

import numpy as np
import jax
import jax.numpy as jnp
from jax.experimental import pallas as pl
from jax.experimental.pallas import tpu as pltpu

LANE = 128


def _ceil_to(v, m):
    return (v + m - 1) // m * m


def _pick_block_rows(Hp, Wp, requested=None):
    """Pooled rows per band: divides Hp and keeps the output block 8-aligned."""
    start = requested if requested is not None else max(1, 1024 // max(Wp, 1))
    start = max(1, min(int(start), Hp))
    for bh in range(start, 0, -1):
        if Hp % bh == 0 and (bh * Wp) % 8 == 0:
            return bh
    return Hp  # full map: block == full dim is always legal


def _default_vmem_limit():
    try:
        cap = pltpu.get_tpu_info().vmem_capacity_bytes
        return min(112 * 1024 * 1024, int(cap * 0.8))
    except Exception:  # query unavailable -> conservative default
        return 48 * 1024 * 1024


def _im2col(buf, n_out, Wp, Hp, g0, need_dy_mask):
    """Build the (n_out*Wp, 9*C) bf16 im2col patch.

    `buf` (f32, (M_buf, C)) carries one halo row above/below the n_out output
    rows, laid out so the tap (dy, dx) for output flat index m lives at
    buf[m + (1+dy)*Wp + dx].  Column zero-padding is applied with masks; row
    masks only when `need_dy_mask` (conv2), using the global row g0 + i.
    """
    M_buf, _ = buf.shape
    M_out = n_out * Wp
    m_idx = jax.lax.broadcasted_iota(jnp.int32, (M_out, 1), 0)
    if Wp & (Wp - 1) == 0:
        i_loc = m_idx >> (Wp.bit_length() - 1)
        j_idx = m_idx & (Wp - 1)
    else:
        i_loc = m_idx // Wp
        j_idx = m_idx - i_loc * Wp
    # hoisted masks (reused across the three dy taps)
    left_ok = j_idx >= 1            # dx == -1 stays in-image
    right_ok = j_idx <= Wp - 2      # dx == +1 stays in-image
    if need_dy_mask:
        i_glob = i_loc + g0
        top_ok = i_glob >= 1        # dy == -1 stays in-image
        bot_ok = i_glob <= Hp - 2   # dy == +1 stays in-image

    taps = []
    for dy in (-1, 0, 1):
        for dx in (-1, 0, 1):
            shift = (1 + dy) * Wp + dx
            if shift == 0:
                t = buf[:M_out]
            else:
                t = pltpu.roll(buf, shift=(-shift) % M_buf, axis=0)[:M_out]
            valid = None
            if dx == -1:
                valid = left_ok
            elif dx == 1:
                valid = right_ok
            if need_dy_mask and dy != 0:
                dmask = top_ok if dy == -1 else bot_ok
                valid = dmask if valid is None else jnp.logical_and(valid, dmask)
            if valid is not None:
                t = jnp.where(valid, t, 0.0)        # select in f32 (v5e-safe)
            taps.append(t.astype(jnp.bfloat16))     # per-tap cast: halves concat
    return jnp.concatenate(taps, axis=1)


def down_kernel(x_ref, w1_ref, s1_ref, b1_ref, w2_ref, s2_ref, b2_ref, o_ref):
    # x_ref : (Hp+4, 2, Wp, 2*Cp) bf16  full spatially zero-padded image
    # w*_ref: (9*Cin_p, Cout_p)    bf16  tap-major weight slab (VMEM-resident)
    # s*/b* : (1, Cout_p)          f32   folded BN scale / bias
    # o_ref : (BH*Wp, Cop)         f32   one row-band of the flattened output
    Hp4, _, Wp, two_cp = x_ref.shape
    Hp = int(Hp4) - 4
    Wp = int(Wp)
    Cp = int(two_cp) // 2
    Mo, Cop = int(o_ref.shape[0]), int(o_ref.shape[1])
    BH = Mo // Wp          # pooled output rows in this band
    EH = BH + 4            # pooled rows loaded (2-row halo each side)
    HH = BH + 2            # conv1 rows produced (1-row halo for conv2)

    r0 = pl.program_id(1) * BH   # global pooled row of this band's first output
    #                              (== slice start in the 2-row-padded array)

    # ---------------- MaxPool2d(2) over the band (+halo) ----------------
    xb = x_ref[pl.ds(r0, EH)]                          # (EH, 2, Wp, 2*Cp) bf16
    hmax = jnp.maximum(xb[:, 0], xb[:, 1])             # row-pair max (exact in bf16)
    pooled = jnp.maximum(hmax[:, :, :Cp], hmax[:, :, Cp:]).astype(jnp.float32)
    flat = pooled.reshape(EH * Wp, Cp)                 # (EH*Wp, Cp) f32

    # ---------------- conv1 + BN + ReLU (one MXU matmul) ----------------
    # Row zero-padding comes from the pooled zero halo rows -> no dy masks.
    p1 = _im2col(flat, HH, Wp, Hp, None, False)        # (HH*Wp, 9*Cp) bf16
    acc1 = jnp.dot(p1, w1_ref[...], preferred_element_type=jnp.float32)
    h = jnp.maximum(acc1 * s1_ref[...] + b1_ref[...], 0.0)   # (HH*Wp, Cop) f32

    # ---------------- conv2 + BN + ReLU ----------------
    # h halo rows outside the image must contribute zero -> global-row dy masks.
    p2 = _im2col(h, BH, Wp, Hp, r0, True)              # (BH*Wp, 9*Cop) bf16
    acc2 = jnp.dot(p2, w2_ref[...], preferred_element_type=jnp.float32)
    out = jnp.maximum(acc2 * s2_ref[...] + b2_ref[...], 0.0)
    o_ref[...] = out.astype(o_ref.dtype)


@functools.partial(jax.jit, static_argnames=("block_rows",))
def down_forward(x_nchw, params, block_rows=None):
    w1, s1, b1, w2, s2, b2 = params                 # HWIO weights, (Cout,) scale/bias
    N, C, H, W = x_nchw.shape
    Hp, Wp = H // 2, W // 2
    Cout = w1.shape[-1]
    Cp, Cop = _ceil_to(C, LANE), _ceil_to(Cout, LANE)
    M = Hp * Wp
    BH = _pick_block_rows(Hp, Wp, block_rows)
    n_hblk = Hp // BH

    # NCHW -> NHWC, bf16 cast, lane-pad channels, zero-pad 2 pooled rows each
    # side (conv row padding for free); fuses into one HBM pass under jit.
    x = jnp.transpose(x_nchw, (0, 2, 3, 1)).astype(jnp.bfloat16)
    x = jnp.pad(x, ((0, 0), (4, 4), (0, 0), (0, Cp - C)))
    x_view = x.reshape(N, Hp + 4, 2, Wp, 2 * Cp)     # pool-friendly lane-split view

    # Weights -> lane-dense 2-D bf16 slabs; BN vectors -> (1, Cout_p) f32.
    def prep_w(w, cip, cop):
        ci, co = w.shape[2], w.shape[3]
        w = jnp.pad(w, ((0, 0), (0, 0), (0, cip - ci), (0, cop - co)))
        return w.reshape(9 * cip, cop).astype(jnp.bfloat16)

    def prep_v(v, cop):
        return jnp.pad(v, (0, cop - v.shape[0])).reshape(1, cop).astype(jnp.float32)

    w1_2d, w2_2d = prep_w(w1, Cp, Cop), prep_w(w2, Cop, Cop)
    s1p, b1p = prep_v(s1, Cop), prep_v(b1, Cop)
    s2p, b2p = prep_v(s2, Cop), prep_v(b2, Cop)

    flops = (2 * N * n_hblk * (BH + 2) * Wp * (9 * Cp) * Cop   # conv1 (incl. halo)
             + 2 * N * M * (9 * Cop) * Cop)                    # conv2
    bytes_accessed = (N * (Hp + 4) * 2 * Wp * 2 * Cp * 2       # bf16 input
                      + (9 * Cp * Cop + 9 * Cop * Cop) * 2     # bf16 weights
                      + 4 * Cop * 4                            # scales / biases
                      + N * M * Cop * 4)                       # f32 output

    out_flat = pl.pallas_call(
        down_kernel,
        out_shape=jax.ShapeDtypeStruct((N, M, Cop), jnp.float32),
        grid_spec=pltpu.PrefetchScalarGridSpec(
            num_scalar_prefetch=0,
            grid=(N, n_hblk),
            in_specs=[
                # full padded image, constant over the band axis -> DMA'd once
                # per batch element and kept VMEM-resident across its bands.
                pl.BlockSpec((None, Hp + 4, 2, Wp, 2 * Cp),
                             lambda n, b: (n, 0, 0, 0, 0)),
                pl.BlockSpec((9 * Cp, Cop), lambda n, b: (0, 0)),
                pl.BlockSpec((1, Cop), lambda n, b: (0, 0)),
                pl.BlockSpec((1, Cop), lambda n, b: (0, 0)),
                pl.BlockSpec((9 * Cop, Cop), lambda n, b: (0, 0)),
                pl.BlockSpec((1, Cop), lambda n, b: (0, 0)),
                pl.BlockSpec((1, Cop), lambda n, b: (0, 0)),
            ],
            out_specs=pl.BlockSpec((None, BH * Wp, Cop), lambda n, b: (n, b, 0)),
        ),
        compiler_params=pltpu.CompilerParams(
            dimension_semantics=("parallel", "parallel"),
            vmem_limit_bytes=_default_vmem_limit(),
        ),
        cost_estimate=pl.CostEstimate(
            flops=flops, transcendentals=0, bytes_accessed=bytes_accessed),
    )(x_view, w1_2d, s1p, b1p, w2_2d, s2p, b2p)

    out = out_flat.reshape(N, Hp, Wp, Cop)[..., :Cout]   # drop padded channels
    return jnp.transpose(out, (0, 3, 1, 2))              # NHWC -> NCHW


def init_params(key, in_ch, out_ch, eps=1e-5):
    """Deterministic synthetic parameters matching nn.Conv2d/nn.BatchNorm2d shapes."""
    k1, k2, k3, k4 = jax.random.split(key, 4)
    w1_t = jax.random.normal(k1, (out_ch, in_ch, 3, 3), jnp.float32) * 0.1
    cb1 = jax.random.normal(k2, (out_ch,), jnp.float32) * 0.1
    w2_t = jax.random.normal(k3, (out_ch, out_ch, 3, 3), jnp.float32) * 0.1
    cb2 = jax.random.normal(k4, (out_ch,), jnp.float32) * 0.1
    # BatchNorm (eval mode) params: gamma, beta, running_mean, running_var
    ar = jnp.arange(out_ch, dtype=jnp.float32)
    g1, be1, m1, v1 = 1.0 + 0.05 * ar, 0.01 * ar, 0.02 * ar, 1.0 + 0.1 * ar
    g2, be2, m2, v2 = 1.0 - 0.02 * ar, -0.01 * ar, -0.03 * ar, 0.5 + 0.05 * ar
    s1 = g1 / jnp.sqrt(v1 + eps)
    b1 = be1 + (cb1 - m1) * s1
    s2 = g2 / jnp.sqrt(v2 + eps)
    b2 = be2 + (cb2 - m2) * s2
    w1 = jnp.transpose(w1_t, (2, 3, 1, 0))   # OIHW -> HWIO
    w2 = jnp.transpose(w2_t, (2, 3, 1, 0))
    return (w1, s1, b1, w2, s2, b2)


def reference_forward(x_nchw, params):
    """Pure-JAX reference of the same forward pass (for validation)."""
    w1, s1, b1, w2, s2, b2 = params
    x = jnp.transpose(x_nchw, (0, 2, 3, 1))
    N, H, W, C = x.shape
    pooled = jnp.max(x.reshape(N, H // 2, 2, W // 2, 2, C), axis=(2, 4))

    def conv_bn_relu(inp, w, s, b):
        y = jax.lax.conv_general_dilated(
            inp, w, window_strides=(1, 1), padding="SAME",
            dimension_numbers=("NHWC", "HWIO", "NHWC"))
        return jnp.maximum(y * s.reshape(1, 1, 1, -1) + b.reshape(1, 1, 1, -1), 0.0)

    h = conv_bn_relu(pooled, w1, s1, b1)
    o = conv_bn_relu(h, w2, s2, b2)
    return jnp.transpose(o, (0, 3, 1, 2))


if __name__ == "__main__":
    key = jax.random.PRNGKey(0)
    kx, kp = jax.random.split(key)

    N, in_ch, out_ch, H, W = 2, 4, 8, 16, 16
    x = jax.random.normal(kx, (N, in_ch, H, W), jnp.float32)   # NCHW like PyTorch
    params = init_params(kp, in_ch, out_ch)

    ref = jax.block_until_ready(reference_forward(x, params))

    # Exercise both the multi-band path (2 spatial blocks, interior halo) and
    # the auto-picked single-band path.
    out_banded = jax.block_until_ready(down_forward(x, params, block_rows=4))
    out_auto = jax.block_until_ready(down_forward(x, params))

    for out in (out_banded, out_auto):
        assert out.shape == (N, out_ch, H // 2, W // 2), out.shape
        # bf16 input + bf16 MXU operands (f32 accumulation) -> loose tolerance
        np.testing.assert_allclose(np.asarray(out), np.asarray(ref),
                                   rtol=3e-2, atol=3e-2)

    print("KERNEL_OK")
</pallas_src>

<mosaic_0001>
module attributes {stable_mosaic.version = 11 : i64} {
  func.func @down_kernel(%arg0: i32, %arg1: i32, %arg2: memref<1x12x2x8x256xbf16, #tpu.memory_space<vmem>>, %arg3: memref<1152x128xbf16, #tpu.memory_space<vmem>>, %arg4: memref<1x128xf32, #tpu.memory_space<vmem>>, %arg5: memref<1x128xf32, #tpu.memory_space<vmem>>, %arg6: memref<1152x128xbf16, #tpu.memory_space<vmem>>, %arg7: memref<1x128xf32, #tpu.memory_space<vmem>>, %arg8: memref<1x128xf32, #tpu.memory_space<vmem>>, %arg9: memref<1x32x128xf32, #tpu.memory_space<vmem>>) attributes {dimension_semantics = [#tpu.dimension_semantics<parallel>, #tpu.dimension_semantics<parallel>], iteration_bounds = array<i64: 2, 2>, scalar_prefetch = 0 : i64, scratch_operands = 0 : i64, tpu.core_type = #tpu.core_type<tc>, window_params = [{transform_indices = @transform_0, window_bounds = array<i64: 1, 12, 2, 8, 256>}, {pipeline_mode = #tpu.pipeline_mode<synchronous>, transform_indices = @transform_1, window_bounds = array<i64: 1152, 128>}, {pipeline_mode = #tpu.pipeline_mode<synchronous>, transform_indices = @transform_2, window_bounds = array<i64: 1, 128>}, {pipeline_mode = #tpu.pipeline_mode<synchronous>, transform_indices = @transform_3, window_bounds = array<i64: 1, 128>}, {pipeline_mode = #tpu.pipeline_mode<synchronous>, transform_indices = @transform_4, window_bounds = array<i64: 1152, 128>}, {pipeline_mode = #tpu.pipeline_mode<synchronous>, transform_indices = @transform_5, window_bounds = array<i64: 1, 128>}, {pipeline_mode = #tpu.pipeline_mode<synchronous>, transform_indices = @transform_6, window_bounds = array<i64: 1, 128>}, {transform_indices = @transform_7, window_bounds = array<i64: 1, 32, 128>}]} {
    %c4_i32 = arith.constant 4 : i32
    %0 = arith.muli %arg1, %c4_i32 : i32
    %c0 = arith.constant 0 : index
    %1 = arith.index_cast %0 : i32 to index
    %c0_0 = arith.constant 0 : index
    %c0_1 = arith.constant 0 : index
    %c0_2 = arith.constant 0 : index
    %2 = vector.load %arg2[%c0, %1, %c0_0, %c0_1, %c0_2] : memref<1x12x2x8x256xbf16, #tpu.memory_space<vmem>>, vector<1x8x2x8x256xbf16>
    %3 = vector.shape_cast %2 : vector<1x8x2x8x256xbf16> to vector<8x2x8x256xbf16>
    %4 = vector.extract_strided_slice %3 {offsets = [0, 0, 0, 0], sizes = [8, 1, 8, 256], strides = [1, 1, 1, 1]} : vector<8x2x8x256xbf16> to vector<8x1x8x256xbf16>
    %5 = vector.shape_cast %4 : vector<8x1x8x256xbf16> to vector<8x8x256xbf16>
    %6 = vector.extract_strided_slice %3 {offsets = [0, 1, 0, 0], sizes = [8, 1, 8, 256], strides = [1, 1, 1, 1]} : vector<8x2x8x256xbf16> to vector<8x1x8x256xbf16>
    %7 = vector.shape_cast %6 : vector<8x1x8x256xbf16> to vector<8x8x256xbf16>
    %8 = arith.maximumf %5, %7 : vector<8x8x256xbf16>
    %9 = vector.extract_strided_slice %8 {offsets = [0, 0, 0], sizes = [8, 8, 128], strides = [1, 1, 1]} : vector<8x8x256xbf16> to vector<8x8x128xbf16>
    %10 = vector.extract_strided_slice %8 {offsets = [0, 0, 128], sizes = [8, 8, 128], strides = [1, 1, 1]} : vector<8x8x256xbf16> to vector<8x8x128xbf16>
    %11 = arith.maximumf %9, %10 : vector<8x8x128xbf16>
    %12 = arith.extf %11 : vector<8x8x128xbf16> to vector<8x8x128xf32>
    %13 = vector.shape_cast %12 : vector<8x8x128xf32> to vector<64x128xf32>
    %14 = tpu.iota {dimensions = array<i32: 0>} : vector<48x1xi32>
    %c7_i32 = arith.constant 7 : i32
    %15 = vector.broadcast %c7_i32 : i32 to vector<48x1xi32>
    %16 = arith.andi %14, %15 : vector<48x1xi32>
    %c1_i32 = arith.constant 1 : i32
    %17 = vector.broadcast %c1_i32 : i32 to vector<48x1xi32>
    %18 = arith.cmpi sge, %16, %17 : vector<48x1xi32>
    %c6_i32 = arith.constant 6 : i32
    %19 = vector.broadcast %c6_i32 : i32 to vector<48x1xi32>
    %20 = arith.cmpi sle, %16, %19 : vector<48x1xi32>
    %c1_i32_3 = arith.constant 1 : i32
    %21 = tpu.dynamic_rotate %13 by %c1_i32_3 dim 0 : vector<64x128xf32>, i32 -> vector<64x128xf32>
    %22 = vector.extract_strided_slice %21 {offsets = [0, 0], sizes = [48, 128], strides = [1, 1]} : vector<64x128xf32> to vector<48x128xf32>
    %cst = arith.constant 0.000000e+00 : f32
    %23 = vector.shape_cast %18 : vector<48x1xi1> to vector<48x1xi1>
    %24 = vector.broadcast %23 : vector<48x1xi1> to vector<48x128xi1>
    %25 = vector.broadcast %cst : f32 to vector<48x128xf32>
    %26 = arith.select %24, %22, %25 : vector<48x128xi1>, vector<48x128xf32>
    %27 = arith.truncf %26 : vector<48x128xf32> to vector<48x128xbf16>
    %28 = vector.extract_strided_slice %13 {offsets = [0, 0], sizes = [48, 128], strides = [1, 1]} : vector<64x128xf32> to vector<48x128xf32>
    %29 = arith.truncf %28 : vector<48x128xf32> to vector<48x128xbf16>
    %c63_i32 = arith.constant 63 : i32
    %30 = tpu.dynamic_rotate %13 by %c63_i32 dim 0 : vector<64x128xf32>, i32 -> vector<64x128xf32>
    %31 = vector.extract_strided_slice %30 {offsets = [0, 0], sizes = [48, 128], strides = [1, 1]} : vector<64x128xf32> to vector<48x128xf32>
    %cst_4 = arith.constant 0.000000e+00 : f32
    %32 = vector.shape_cast %20 : vector<48x1xi1> to vector<48x1xi1>
    %33 = vector.broadcast %32 : vector<48x1xi1> to vector<48x128xi1>
    %34 = vector.broadcast %cst_4 : f32 to vector<48x128xf32>
    %35 = arith.select %33, %31, %34 : vector<48x128xi1>, vector<48x128xf32>
    %36 = arith.truncf %35 : vector<48x128xf32> to vector<48x128xbf16>
    %c57_i32 = arith.constant 57 : i32
    %37 = tpu.dynamic_rotate %13 by %c57_i32 dim 0 : vector<64x128xf32>, i32 -> vector<64x128xf32>
    %38 = vector.extract_strided_slice %37 {offsets = [0, 0], sizes = [48, 128], strides = [1, 1]} : vector<64x128xf32> to vector<48x128xf32>
    %cst_5 = arith.constant 0.000000e+00 : f32
    %39 = vector.shape_cast %18 : vector<48x1xi1> to vector<48x1xi1>
    %40 = vector.broadcast %39 : vector<48x1xi1> to vector<48x128xi1>
    %41 = vector.broadcast %cst_5 : f32 to vector<48x128xf32>
    %42 = arith.select %40, %38, %41 : vector<48x128xi1>, vector<48x128xf32>
    %43 = arith.truncf %42 : vector<48x128xf32> to vector<48x128xbf16>
    %c56_i32 = arith.constant 56 : i32
    %44 = tpu.dynamic_rotate %13 by %c56_i32 dim 0 : vector<64x128xf32>, i32 -> vector<64x128xf32>
    %45 = vector.extract_strided_slice %44 {offsets = [0, 0], sizes = [48, 128], strides = [1, 1]} : vector<64x128xf32> to vector<48x128xf32>
    %46 = arith.truncf %45 : vector<48x128xf32> to vector<48x128xbf16>
    %c55_i32 = arith.constant 55 : i32
    %47 = tpu.dynamic_rotate %13 by %c55_i32 dim 0 : vector<64x128xf32>, i32 -> vector<64x128xf32>
    %48 = vector.extract_strided_slice %47 {offsets = [0, 0], sizes = [48, 128], strides = [1, 1]} : vector<64x128xf32> to vector<48x128xf32>
    %cst_6 = arith.constant 0.000000e+00 : f32
    %49 = vector.shape_cast %20 : vector<48x1xi1> to vector<48x1xi1>
    %50 = vector.broadcast %49 : vector<48x1xi1> to vector<48x128xi1>
    %51 = vector.broadcast %cst_6 : f32 to vector<48x128xf32>
    %52 = arith.select %50, %48, %51 : vector<48x128xi1>, vector<48x128xf32>
    %53 = arith.truncf %52 : vector<48x128xf32> to vector<48x128xbf16>
    %c49_i32 = arith.constant 49 : i32
    %54 = tpu.dynamic_rotate %13 by %c49_i32 dim 0 : vector<64x128xf32>, i32 -> vector<64x128xf32>
    %55 = vector.extract_strided_slice %54 {offsets = [0, 0], sizes = [48, 128], strides = [1, 1]} : vector<64x128xf32> to vector<48x128xf32>
    %cst_7 = arith.constant 0.000000e+00 : f32
    %56 = vector.shape_cast %18 : vector<48x1xi1> to vector<48x1xi1>
    %57 = vector.broadcast %56 : vector<48x1xi1> to vector<48x128xi1>
    %58 = vector.broadcast %cst_7 : f32 to vector<48x128xf32>
    %59 = arith.select %57, %55, %58 : vector<48x128xi1>, vector<48x128xf32>
    %60 = arith.truncf %59 : vector<48x128xf32> to vector<48x128xbf16>
    %c48_i32 = arith.constant 48 : i32
    %61 = tpu.dynamic_rotate %13 by %c48_i32 dim 0 : vector<64x128xf32>, i32 -> vector<64x128xf32>
    %62 = vector.extract_strided_slice %61 {offsets = [0, 0], sizes = [48, 128], strides = [1, 1]} : vector<64x128xf32> to vector<48x128xf32>
    %63 = arith.truncf %62 : vector<48x128xf32> to vector<48x128xbf16>
    %c47_i32 = arith.constant 47 : i32
    %64 = tpu.dynamic_rotate %13 by %c47_i32 dim 0 : vector<64x128xf32>, i32 -> vector<64x128xf32>
    %65 = vector.extract_strided_slice %64 {offsets = [0, 0], sizes = [48, 128], strides = [1, 1]} : vector<64x128xf32> to vector<48x128xf32>
    %cst_8 = arith.constant 0.000000e+00 : f32
    %66 = vector.shape_cast %20 : vector<48x1xi1> to vector<48x1xi1>
    %67 = vector.broadcast %66 : vector<48x1xi1> to vector<48x128xi1>
    %68 = vector.broadcast %cst_8 : f32 to vector<48x128xf32>
    %69 = arith.select %67, %65, %68 : vector<48x128xi1>, vector<48x128xf32>
    %70 = arith.truncf %69 : vector<48x128xf32> to vector<48x128xbf16>
    %71 = tpu.concatenate %27, %29, %36, %43, %46, %53, %60, %63, %70 in 1 : vector<48x128xbf16>, vector<48x128xbf16>, vector<48x128xbf16>, vector<48x128xbf16>, vector<48x128xbf16>, vector<48x128xbf16>, vector<48x128xbf16>, vector<48x128xbf16>, vector<48x128xbf16> -> vector<48x1152xbf16>
    %c0_9 = arith.constant 0 : index
    %c0_10 = arith.constant 0 : index
    %72 = vector.load %arg3[%c0_9, %c0_10] : memref<1152x128xbf16, #tpu.memory_space<vmem>>, vector<1152x128xbf16>
    %cst_11 = arith.constant dense<0.000000e+00> : vector<48x128xf32>
    %73 = tpu.matmul %71, %72, %cst_11 {dimension_numbers = #tpu.dot_dimension_numbers<[1], [0], [0], [1], [0, 0, 1, 1], [], []>} : vector<48x1152xbf16>, vector<1152x128xbf16>, vector<48x128xf32> -> vector<48x128xf32>
    %c0_12 = arith.constant 0 : index
    %c0_13 = arith.constant 0 : index
    %74 = vector.load %arg4[%c0_12, %c0_13] : memref<1x128xf32, #tpu.memory_space<vmem>>, vector<1x128xf32>
    %75 = vector.broadcast %74 : vector<1x128xf32> to vector<48x128xf32>
    %76 = arith.mulf %73, %75 : vector<48x128xf32>
    %c0_14 = arith.constant 0 : index
    %c0_15 = arith.constant 0 : index
    %77 = vector.load %arg5[%c0_14, %c0_15] : memref<1x128xf32, #tpu.memory_space<vmem>>, vector<1x128xf32>
    %78 = vector.broadcast %77 : vector<1x128xf32> to vector<48x128xf32>
    %79 = arith.addf %76, %78 : vector<48x128xf32>
    %cst_16 = arith.constant 0.000000e+00 : f32
    %80 = vector.broadcast %cst_16 : f32 to vector<48x128xf32>
    %81 = arith.maximumf %79, %80 : vector<48x128xf32>
    %82 = tpu.iota {dimensions = array<i32: 0>} : vector<32x1xi32>
    %c3_i32 = arith.constant 3 : i32
    %83 = vector.broadcast %c3_i32 : i32 to vector<32x1xi32>
    %84 = arith.shrsi %82, %83 : vector<32x1xi32>
    %c7_i32_17 = arith.constant 7 : i32
    %85 = vector.broadcast %c7_i32_17 : i32 to vector<32x1xi32>
    %86 = arith.andi %82, %85 : vector<32x1xi32>
    %c1_i32_18 = arith.constant 1 : i32
    %87 = vector.broadcast %c1_i32_18 : i32 to vector<32x1xi32>
    %88 = arith.cmpi sge, %86, %87 : vector<32x1xi32>
    %c6_i32_19 = arith.constant 6 : i32
    %89 = vector.broadcast %c6_i32_19 : i32 to vector<32x1xi32>
    %90 = arith.cmpi sle, %86, %89 : vector<32x1xi32>
    %91 = vector.broadcast %0 : i32 to vector<32x1xi32>
    %92 = arith.addi %84, %91 : vector<32x1xi32>
    %c1_i32_20 = arith.constant 1 : i32
    %93 = vector.broadcast %c1_i32_20 : i32 to vector<32x1xi32>
    %94 = arith.cmpi sge, %92, %93 : vector<32x1xi32>
    %c6_i32_21 = arith.constant 6 : i32
    %95 = vector.broadcast %c6_i32_21 : i32 to vector<32x1xi32>
    %96 = arith.cmpi sle, %92, %95 : vector<32x1xi32>
    %c1_i32_22 = arith.constant 1 : i32
    %97 = tpu.dynamic_rotate %81 by %c1_i32_22 dim 0 : vector<48x128xf32>, i32 -> vector<48x128xf32>
    %98 = vector.extract_strided_slice %97 {offsets = [0, 0], sizes = [32, 128], strides = [1, 1]} : vector<48x128xf32> to vector<32x128xf32>
    %99 = arith.andi %88, %94 : vector<32x1xi1>
    %cst_23 = arith.constant 0.000000e+00 : f32
    %100 = vector.shape_cast %99 : vector<32x1xi1> to vector<32x1xi1>
    %101 = vector.broadcast %100 : vector<32x1xi1> to vector<32x128xi1>
    %102 = vector.broadcast %cst_23 : f32 to vector<32x128xf32>
    %103 = arith.select %101, %98, %102 : vector<32x128xi1>, vector<32x128xf32>
    %104 = arith.truncf %103 : vector<32x128xf32> to vector<32x128xbf16>
    %105 = vector.extract_strided_slice %81 {offsets = [0, 0], sizes = [32, 128], strides = [1, 1]} : vector<48x128xf32> to vector<32x128xf32>
    %cst_24 = arith.constant 0.000000e+00 : f32
    %106 = vector.shape_cast %94 : vector<32x1xi1> to vector<32x1xi1>
    %107 = vector.broadcast %106 : vector<32x1xi1> to vector<32x128xi1>
    %108 = vector.broadcast %cst_24 : f32 to vector<32x128xf32>
    %109 = arith.select %107, %105, %108 : vector<32x128xi1>, vector<32x128xf32>
    %110 = arith.truncf %109 : vector<32x128xf32> to vector<32x128xbf16>
    %c47_i32_25 = arith.constant 47 : i32
    %111 = tpu.dynamic_rotate %81 by %c47_i32_25 dim 0 : vector<48x128xf32>, i32 -> vector<48x128xf32>
    %112 = vector.extract_strided_slice %111 {offsets = [0, 0], sizes = [32, 128], strides = [1, 1]} : vector<48x128xf32> to vector<32x128xf32>
    %113 = arith.andi %90, %94 : vector<32x1xi1>
    %cst_26 = arith.constant 0.000000e+00 : f32
    %114 = vector.shape_cast %113 : vector<32x1xi1> to vector<32x1xi1>
    %115 = vector.broadcast %114 : vector<32x1xi1> to vector<32x128xi1>
    %116 = vector.broadcast %cst_26 : f32 to vector<32x128xf32>
    %117 = arith.select %115, %112, %116 : vector<32x128xi1>, vector<32x128xf32>
    %118 = arith.truncf %117 : vector<32x128xf32> to vector<32x128xbf16>
    %c41_i32 = arith.constant 41 : i32
    %119 = tpu.dynamic_rotate %81 by %c41_i32 dim 0 : vector<48x128xf32>, i32 -> vector<48x128xf32>
    %120 = vector.extract_strided_slice %119 {offsets = [0, 0], sizes = [32, 128], strides = [1, 1]} : vector<48x128xf32> to vector<32x128xf32>
    %cst_27 = arith.constant 0.000000e+00 : f32
    %121 = vector.shape_cast %88 : vector<32x1xi1> to vector<32x1xi1>
    %122 = vector.broadcast %121 : vector<32x1xi1> to vector<32x128xi1>
    %123 = vector.broadcast %cst_27 : f32 to vector<32x128xf32>
    %124 = arith.select %122, %120, %123 : vector<32x128xi1>, vector<32x128xf32>
    %125 = arith.truncf %124 : vector<32x128xf32> to vector<32x128xbf16>
    %c40_i32 = arith.constant 40 : i32
    %126 = tpu.dynamic_rotate %81 by %c40_i32 dim 0 : vector<48x128xf32>, i32 -> vector<48x128xf32>
    %127 = vector.extract_strided_slice %126 {offsets = [0, 0], sizes = [32, 128], strides = [1, 1]} : vector<48x128xf32> to vector<32x128xf32>
    %128 = arith.truncf %127 : vector<32x128xf32> to vector<32x128xbf16>
    %c39_i32 = arith.constant 39 : i32
    %129 = tpu.dynamic_rotate %81 by %c39_i32 dim 0 : vector<48x128xf32>, i32 -> vector<48x128xf32>
    %130 = vector.extract_strided_slice %129 {offsets = [0, 0], sizes = [32, 128], strides = [1, 1]} : vector<48x128xf32> to vector<32x128xf32>
    %cst_28 = arith.constant 0.000000e+00 : f32
    %131 = vector.shape_cast %90 : vector<32x1xi1> to vector<32x1xi1>
    %132 = vector.broadcast %131 : vector<32x1xi1> to vector<32x128xi1>
    %133 = vector.broadcast %cst_28 : f32 to vector<32x128xf32>
    %134 = arith.select %132, %130, %133 : vector<32x128xi1>, vector<32x128xf32>
    %135 = arith.truncf %134 : vector<32x128xf32> to vector<32x128xbf16>
    %c33_i32 = arith.constant 33 : i32
    %136 = tpu.dynamic_rotate %81 by %c33_i32 dim 0 : vector<48x128xf32>, i32 -> vector<48x128xf32>
    %137 = vector.extract_strided_slice %136 {offsets = [0, 0], sizes = [32, 128], strides = [1, 1]} : vector<48x128xf32> to vector<32x128xf32>
    %138 = arith.andi %88, %96 : vector<32x1xi1>
    %cst_29 = arith.constant 0.000000e+00 : f32
    %139 = vector.shape_cast %138 : vector<32x1xi1> to vector<32x1xi1>
    %140 = vector.broadcast %139 : vector<32x1xi1> to vector<32x128xi1>
    %141 = vector.broadcast %cst_29 : f32 to vector<32x128xf32>
    %142 = arith.select %140, %137, %141 : vector<32x128xi1>, vector<32x128xf32>
    %143 = arith.truncf %142 : vector<32x128xf32> to vector<32x128xbf16>
    %c32_i32 = arith.constant 32 : i32
    %144 = tpu.dynamic_rotate %81 by %c32_i32 dim 0 : vector<48x128xf32>, i32 -> vector<48x128xf32>
    %145 = vector.extract_strided_slice %144 {offsets = [0, 0], sizes = [32, 128], strides = [1, 1]} : vector<48x128xf32> to vector<32x128xf32>
    %cst_30 = arith.constant 0.000000e+00 : f32
    %146 = vector.shape_cast %96 : vector<32x1xi1> to vector<32x1xi1>
    %147 = vector.broadcast %146 : vector<32x1xi1> to vector<32x128xi1>
    %148 = vector.broadcast %cst_30 : f32 to vector<32x128xf32>
    %149 = arith.select %147, %145, %148 : vector<32x128xi1>, vector<32x128xf32>
    %150 = arith.truncf %149 : vector<32x128xf32> to vector<32x128xbf16>
    %c31_i32 = arith.constant 31 : i32
    %151 = tpu.dynamic_rotate %81 by %c31_i32 dim 0 : vector<48x128xf32>, i32 -> vector<48x128xf32>
    %152 = vector.extract_strided_slice %151 {offsets = [0, 0], sizes = [32, 128], strides = [1, 1]} : vector<48x128xf32> to vector<32x128xf32>
    %153 = arith.andi %90, %96 : vector<32x1xi1>
    %cst_31 = arith.constant 0.000000e+00 : f32
    %154 = vector.shape_cast %153 : vector<32x1xi1> to vector<32x1xi1>
    %155 = vector.broadcast %154 : vector<32x1xi1> to vector<32x128xi1>
    %156 = vector.broadcast %cst_31 : f32 to vector<32x128xf32>
    %157 = arith.select %155, %152, %156 : vector<32x128xi1>, vector<32x128xf32>
    %158 = arith.truncf %157 : vector<32x128xf32> to vector<32x128xbf16>
    %159 = tpu.concatenate %104, %110, %118, %125, %128, %135, %143, %150, %158 in 1 : vector<32x128xbf16>, vector<32x128xbf16>, vector<32x128xbf16>, vector<32x128xbf16>, vector<32x128xbf16>, vector<32x128xbf16>, vector<32x128xbf16>, vector<32x128xbf16>, vector<32x128xbf16> -> vector<32x1152xbf16>
    %c0_32 = arith.constant 0 : index
    %c0_33 = arith.constant 0 : index
    %160 = vector.load %arg6[%c0_32, %c0_33] : memref<1152x128xbf16, #tpu.memory_space<vmem>>, vector<1152x128xbf16>
    %cst_34 = arith.constant dense<0.000000e+00> : vector<32x128xf32>
    %161 = tpu.matmul %159, %160, %cst_34 {dimension_numbers = #tpu.dot_dimension_numbers<[1], [0], [0], [1], [0, 0, 1, 1], [], []>} : vector<32x1152xbf16>, vector<1152x128xbf16>, vector<32x128xf32> -> vector<32x128xf32>
    %c0_35 = arith.constant 0 : index
    %c0_36 = arith.constant 0 : index
    %162 = vector.load %arg7[%c0_35, %c0_36] : memref<1x128xf32, #tpu.memory_space<vmem>>, vector<1x128xf32>
    %163 = vector.broadcast %162 : vector<1x128xf32> to vector<32x128xf32>
    %164 = arith.mulf %161, %163 : vector<32x128xf32>
    %c0_37 = arith.constant 0 : index
    %c0_38 = arith.constant 0 : index
    %165 = vector.load %arg8[%c0_37, %c0_38] : memref<1x128xf32, #tpu.memory_space<vmem>>, vector<1x128xf32>
    %166 = vector.broadcast %165 : vector<1x128xf32> to vector<32x128xf32>
    %167 = arith.addf %164, %166 : vector<32x128xf32>
    %cst_39 = arith.constant 0.000000e+00 : f32
    %168 = vector.broadcast %cst_39 : f32 to vector<32x128xf32>
    %169 = arith.maximumf %167, %168 : vector<32x128xf32>
    %c0_40 = arith.constant 0 : index
    %c0_41 = arith.constant 0 : index
    %c0_42 = arith.constant 0 : index
    %170 = vector.load %arg9[%c0_40, %c0_41, %c0_42] : memref<1x32x128xf32, #tpu.memory_space<vmem>>, vector<1x32x128xf32>
    %171 = vector.shape_cast %170 : vector<1x32x128xf32> to vector<32x128xf32>
    %172 = vector.shape_cast %169 : vector<32x128xf32> to vector<1x32x128xf32>
    tpu.vector_store %arg9[%c0_40, %c0_41, %c0_42], %172 {strides = array<i32>} : memref<1x32x128xf32, #tpu.memory_space<vmem>>, vector<1x32x128xf32>,
    return
  }
  func.func @transform_0(%arg0: i32, %arg1: i32) -> (i32, i32, i32, i32, i32) {
    %c0_i32 = arith.constant 0 : i32
    %c0_i32_0 = arith.constant 0 : i32
    %c0_i32_1 = arith.constant 0 : i32
    %c0_i32_2 = arith.constant 0 : i32
    %c0_i32_3 = arith.constant 0 : i32
    return %arg0, %c0_i32, %c0_i32_0, %c0_i32_1, %c0_i32_2 : i32, i32, i32, i32, i32
  }
  func.func @transform_1(%arg0: i32, %arg1: i32) -> (i32, i32) {
    %c0_i32 = arith.constant 0 : i32
    %c0_i32_0 = arith.constant 0 : i32
    %c0_i32_1 = arith.constant 0 : i32
    return %c0_i32, %c0_i32_0 : i32, i32
  }
  func.func @transform_2(%arg0: i32, %arg1: i32) -> (i32, i32) {
    %c0_i32 = arith.constant 0 : i32
    %c0_i32_0 = arith.constant 0 : i32
    %c0_i32_1 = arith.constant 0 : i32
    return %c0_i32, %c0_i32_0 : i32, i32
  }
  func.func @transform_3(%arg0: i32, %arg1: i32) -> (i32, i32) {
    %c0_i32 = arith.constant 0 : i32
    %c0_i32_0 = arith.constant 0 : i32
    %c0_i32_1 = arith.constant 0 : i32
    return %c0_i32, %c0_i32_0 : i32, i32
  }
  func.func @transform_4(%arg0: i32, %arg1: i32) -> (i32, i32) {
    %c0_i32 = arith.constant 0 : i32
    %c0_i32_0 = arith.constant 0 : i32
    %c0_i32_1 = arith.constant 0 : i32
    return %c0_i32, %c0_i32_0 : i32, i32
  }
  func.func @transform_5(%arg0: i32, %arg1: i32) -> (i32, i32) {
    %c0_i32 = arith.constant 0 : i32
    %c0_i32_0 = arith.constant 0 : i32
    %c0_i32_1 = arith.constant 0 : i32
    return %c0_i32, %c0_i32_0 : i32, i32
  }
  func.func @transform_6(%arg0: i32, %arg1: i32) -> (i32, i32) {
    %c0_i32 = arith.constant 0 : i32
    %c0_i32_0 = arith.constant 0 : i32
    %c0_i32_1 = arith.constant 0 : i32
    return %c0_i32, %c0_i32_0 : i32, i32
  }
  func.func @transform_7(%arg0: i32, %arg1: i32) -> (i32, i32, i32) {
    %c0_i32 = arith.constant 0 : i32
    %c0_i32_0 = arith.constant 0 : i32
    return %arg0, %arg1, %c0_i32 : i32, i32, i32
  }
}

</mosaic_0001>

<llo_original>
// kernel: down_forward.1
$region0: #{down_forward.1}
  #allocation0 [shape = 'u32[]', space=smem, size = 0x4, offset = 0x4, fixed_abs, tag = 'smem constant byte address 0x4 - core index']
  #allocation1 [shape = 'u32[144,128]{1,0:T(1,128)}', space=vmem, size = 0x12000, scoped, tag = 'internal scratch']
  %s0 = inlined_call_operand.vmem [shape: bf16[2,12,2,8,256], index: 0, kind: input, shape index: {}]
  %s1 = inlined_call_operand.vmem [shape: bf16[1152,128], index: 1, kind: input, shape index: {}]
  %s2 = inlined_call_operand.vmem [shape: f32[1,128], index: 2, kind: input, shape index: {}]
  %s3 = inlined_call_operand.vmem [shape: f32[1,128], index: 3, kind: input, shape index: {}]
  %s4 = inlined_call_operand.vmem [shape: bf16[1152,128], index: 4, kind: input, shape index: {}]
  %s5 = inlined_call_operand.vmem [shape: f32[1,128], index: 5, kind: input, shape index: {}]
  %s6 = inlined_call_operand.vmem [shape: f32[1,128], index: 6, kind: input, shape index: {}]
  %s7 = inlined_call_operand.vmem [shape: f32[2,64,128], index: 7, kind: output, shape index: {}]
  %s8 = sld [smem:[#allocation0]]
  $region61: #{down_forward.1} parent=0
    _
  %s10 = ssub.s32 1, %s8
  %s11 = scalar_select 0, %s10, %s8
  loop: start=0, step=1, limit=6
  $region2: #{down_forward.1} parent=0 // loop_pre_header
    _
  $region3: #{down_forward.1} parent=0 // loop_header
    %s13 = sphi 0, %s17
    %p14 = scmp.ge.s32.totalorder %s13, 6
    %s20 = sphi 0, %s32
    %s21 = sphi 0, %s28
    %s22 = sphi 0, %s20
    %s23 = sphi 0, %s21
    %s24 = sphi 0, %s22
    %s25 = sphi 0, %s23
    %s35 = sphi 0, %s37
    %s38 = sphi 0, %s35
    %s39 = sphi 0, %s38
    %s55 = sphi 0, %s39
    %s59 = sphi 0, %s59
    %s61 = sphi 0, %s59
    %s62 = sphi 0, %s61
    %s76 = sphi 0, %s62
    %s80 = sphi 0, %s80
    %s82 = sphi 0, %s80
    %s83 = sphi 0, %s82
    %s97 = sphi 0, %s83
    %s101 = sphi 0, %s101
    %s103 = sphi 0, %s101
    %s104 = sphi 0, %s103
    %s118 = sphi 0, %s104
    %s122 = sphi 0, %s122
    %s124 = sphi 0, %s122
    %s125 = sphi 0, %s124
    %s139 = sphi 0, %s125
    %s143 = sphi 0, %s143
    %s145 = sphi 0, %s143
    %s146 = sphi 0, %s145
    %s160 = sphi 0, %s146
    %s164 = sphi 0, %s164
    %s166 = sphi 0, %s164
    %s167 = sphi 0, %s166
    %s181 = sphi 0, %s167
    %s189 = sphi 0, %s191
    %s192 = sphi 0, %s189
    %s193 = sphi 0, %s192
    %s209 = sphi 0, %s193
  $region4: #{down_forward.1} parent=0 // loop_header_branch
    %16 = sbr.rel (%p14) target = $region8
  $region5: #{down_forward.1} parent=0 // loop_body
    %s18 = ssub.s32 %s13, 1
    %s19 = ssub.s32 %s13, 2
    %s26 = sadd.s32 1, %s21
    %p27 = scmp.ge.s32.totalorder %s26, 2
    %s28 = scalar_select %p27, 0, %s26
    %s29 = sadd.s32 1, %s20
    %s30 = scalar_select %p27, %s29, %s20
    %p31 = scmp.ge.s32.totalorder %s30, 2
    %s32 = scalar_select %p31, 0, %s30
    %s33 = ssub.s32 %s20, %s32
    %p34 = scmp.eq.s32.totalorder %s33, 0
    %s36 = sadd.s32 %s35, 1
    %s37 = scalar_select %p34, %s35, %s36
    %p40 = pneg %p34
    %p41 = scmp.eq.s32.totalorder %s13, 3
    %p42 = por %p40, %p41
    %p43 = scmp.ne.s32.totalorder %s35, %s38
    %p44 = scmp.eq.s32.totalorder %s13, 0
    %p45 = por %p43, %p44
    %p46 = scmp.ne.s32.totalorder %s35, %s38
    %p47 = scmp.eq.s32.totalorder %s18, 3
    %p48 = por %p46, %p47
    %p49 = scmp.ne.s32.totalorder %s38, %s39
    %p50 = scmp.eq.s32.totalorder %s18, 0
    %p51 = por %p49, %p50
    %p52 = scmp.ne.s32.totalorder %s38, %s39
    %p53 = scmp.eq.s32.totalorder %s19, 3
    %p54 = por %p52, %p53
    %p56 = scmp.ne.s32.totalorder %s39, %s55
    %p57 = scmp.eq.s32.totalorder %s19, 0
    %p58 = por %p56, %p57
    %s60 = sadd.s32 %s59, 1
    %p63 = scmp.eq.s32.totalorder %s13, 3
    %p64 = scmp.ne.s32.totalorder %s59, %s61
    %p65 = scmp.eq.s32.totalorder %s13, 0
    %p66 = por %p64, %p65
    %p67 = scmp.ne.s32.totalorder %s59, %s61
    %p68 = scmp.eq.s32.totalorder %s18, 3
    %p69 = por %p67, %p68
    %p70 = scmp.ne.s32.totalorder %s61, %s62
    %p71 = scmp.eq.s32.totalorder %s18, 0
    %p72 = por %p70, %p71
    %p73 = scmp.ne.s32.totalorder %s61, %s62
    %p74 = scmp.eq.s32.totalorder %s19, 3
    %p75 = por %p73, %p74
    %p77 = scmp.ne.s32.totalorder %s62, %s76
    %p78 = scmp.eq.s32.totalorder %s19, 0
    %p79 = por %p77, %p78
    %s81 = sadd.s32 %s80, 1
    %p84 = scmp.eq.s32.totalorder %s13, 3
    %p85 = scmp.ne.s32.totalorder %s80, %s82
    %p86 = scmp.eq.s32.totalorder %s13, 0
    %p87 = por %p85, %p86
    %p88 = scmp.ne.s32.totalorder %s80, %s82
    %p89 = scmp.eq.s32.totalorder %s18, 3
    %p90 = por %p88, %p89
    %p91 = scmp.ne.s32.totalorder %s82, %s83
    %p92 = scmp.eq.s32.totalorder %s18, 0
    %p93 = por %p91, %p92
    %p94 = scmp.ne.s32.totalorder %s82, %s83
    %p95 = scmp.eq.s32.totalorder %s19, 3
    %p96 = por %p94, %p95
    %p98 = scmp.ne.s32.totalorder %s83, %s97
    %p99 = scmp.eq.s32.totalorder %s19, 0
    %p100 = por %p98, %p99
    %s102 = sadd.s32 %s101, 1
    %p105 = scmp.eq.s32.totalorder %s13, 3
    %p106 = scmp.ne.s32.totalorder %s101, %s103
    %p107 = scmp.eq.s32.totalorder %s13, 0
    %p108 = por %p106, %p107
    %p109 = scmp.ne.s32.totalorder %s101, %s103
    %p110 = scmp.eq.s32.totalorder %s18, 3
    %p111 = por %p109, %p110
    %p112 = scmp.ne.s32.totalorder %s103, %s104
    %p113 = scmp.eq.s32.totalorder %s18, 0
    %p114 = por %p112, %p113
    %p115 = scmp.ne.s32.totalorder %s103, %s104
    %p116 = scmp.eq.s32.totalorder %s19, 3
    %p117 = por %p115, %p116
    %p119 = scmp.ne.s32.totalorder %s104, %s118
    %p120 = scmp.eq.s32.totalorder %s19, 0
    %p121 = por %p119, %p120
    %s123 = sadd.s32 %s122, 1
    %p126 = scmp.eq.s32.totalorder %s13, 3
    %p127 = scmp.ne.s32.totalorder %s122, %s124
    %p128 = scmp.eq.s32.totalorder %s13, 0
    %p129 = por %p127, %p128
    %p130 = scmp.ne.s32.totalorder %s122, %s124
    %p131 = scmp.eq.s32.totalorder %s18, 3
    %p132 = por %p130, %p131
    %p133 = scmp.ne.s32.totalorder %s124, %s125
    %p134 = scmp.eq.s32.totalorder %s18, 0
    %p135 = por %p133, %p134
    %p136 = scmp.ne.s32.totalorder %s124, %s125
    %p137 = scmp.eq.s32.totalorder %s19, 3
    %p138 = por %p136, %p137
    %p140 = scmp.ne.s32.totalorder %s125, %s139
    %p141 = scmp.eq.s32.totalorder %s19, 0
    %p142 = por %p140, %p141
    %s144 = sadd.s32 %s143, 1
    %p147 = scmp.eq.s32.totalorder %s13, 3
    %p148 = scmp.ne.s32.totalorder %s143, %s145
    %p149 = scmp.eq.s32.totalorder %s13, 0
    %p150 = por %p148, %p149
    %p151 = scmp.ne.s32.totalorder %s143, %s145
    %p152 = scmp.eq.s32.totalorder %s18, 3
    %p153 = por %p151, %p152
    %p154 = scmp.ne.s32.totalorder %s145, %s146
    %p155 = scmp.eq.s32.totalorder %s18, 0
    %p156 = por %p154, %p155
    %p157 = scmp.ne.s32.totalorder %s145, %s146
    %p158 = scmp.eq.s32.totalorder %s19, 3
    %p159 = por %p157, %p158
    %p161 = scmp.ne.s32.totalorder %s146, %s160
    %p162 = scmp.eq.s32.totalorder %s19, 0
    %p163 = por %p161, %p162
    %s165 = sadd.s32 %s164, 1
    %p168 = scmp.eq.s32.totalorder %s13, 3
    %p169 = scmp.ne.s32.totalorder %s164, %s166
    %p170 = scmp.eq.s32.totalorder %s13, 0
    %p171 = por %p169, %p170
    %p172 = scmp.ne.s32.totalorder %s164, %s166
    %p173 = scmp.eq.s32.totalorder %s18, 3
    %p174 = por %p172, %p173
    %p175 = scmp.ne.s32.totalorder %s166, %s167
    %p176 = scmp.eq.s32.totalorder %s18, 0
    %p177 = por %p175, %p176
    %p178 = scmp.ne.s32.totalorder %s166, %s167
    %p179 = scmp.eq.s32.totalorder %s19, 3
    %p180 = por %p178, %p179
    %p182 = scmp.ne.s32.totalorder %s167, %s181
    %p183 = scmp.eq.s32.totalorder %s19, 0
    %p184 = por %p182, %p183
    %s185 = ssub.s32 %s20, %s32
    %s186 = ssub.s32 %s21, %s28
    %s187 = sor.u32 %s185, %s186
    %p188 = scmp.eq.s32.totalorder %s187, 0
    %s190 = sadd.s32 %s189, 1
    %s191 = scalar_select %p188, %s189, %s190
    %p194 = pneg %p188
    %p195 = scmp.eq.s32.totalorder %s13, 3
    %p196 = por %p194, %p195
    %p197 = scmp.ne.s32.totalorder %s189, %s192
    %p198 = scmp.eq.s32.totalorder %s13, 0
    %p199 = por %p197, %p198
    %p200 = scmp.ne.s32.totalorder %s189, %s192
    %p201 = scmp.eq.s32.totalorder %s18, 3
    %p202 = por %p200, %p201
    %p203 = scmp.ne.s32.totalorder %s192, %s193
    %p204 = scmp.eq.s32.totalorder %s18, 0
    %p205 = por %p203, %p204
    %p206 = scmp.ne.s32.totalorder %s192, %s193
    %p207 = scmp.eq.s32.totalorder %s19, 3
    %p208 = por %p206, %p207
    %p210 = scmp.ne.s32.totalorder %s193, %s209
    %p211 = scmp.eq.s32.totalorder %s19, 0
    %p212 = por %p210, %p211
    %p213 = scmp.le.s32.totalorder 1, %s13
    %p214 = scmp.lt.s32.totalorder %s13, 5
    %p215 = pnand %p213, %p214
    %p216 = pneg %p215
    // Predicated region
    $region9: #{down_forward.1} parent=5 // pred_check
      _
    $region10: #{down_forward.1} parent=5 // pred_check_branch
      %218 = sbr.rel (%p215) target = $region12
    $region11: #{down_forward.1} parent=5 // pred_region
      %s219 = ssub.s32 %s13, 1
      // Predicated region
      $region13: #{down_forward.1} parent=11 // pred_check
        %p220 = pneg %p72
      $region14: #{down_forward.1} parent=11 // pred_check_branch
        %222 = sbr.rel (%p220) target = $region16
      $region15: #{down_forward.1} parent=11 // pred_region
        _
      $region16: #{down_forward.1} parent=11 // pred_fallthru
        _
      // Predicated region
      $region17: #{down_forward.1} parent=11 // pred_check
        %p223 = pneg %p93
      $region18: #{down_forward.1} parent=11 // pred_check_branch
        %225 = sbr.rel (%p223) target = $region20
      $region19: #{down_forward.1} parent=11 // pred_region
        _
      $region20: #{down_forward.1} parent=11 // pred_fallthru
        _
      // Predicated region
      $region21: #{down_forward.1} parent=11 // pred_check
        %p226 = pneg %p114
      $region22: #{down_forward.1} parent=11 // pred_check_branch
        %228 = sbr.rel (%p226) target = $region24
      $region23: #{down_forward.1} parent=11 // pred_region
        _
      $region24: #{down_forward.1} parent=11 // pred_fallthru
        _
      // Predicated region
      $region25: #{down_forward.1} parent=11 // pred_check
        %p229 = pneg %p135
      $region26: #{down_forward.1} parent=11 // pred_check_branch
        %231 = sbr.rel (%p229) target = $region28
      $region27: #{down_forward.1} parent=11 // pred_region
        _
      $region28: #{down_forward.1} parent=11 // pred_fallthru
        _
      // Predicated region
      $region29: #{down_forward.1} parent=11 // pred_check
        %p232 = pneg %p156
      $region30: #{down_forward.1} parent=11 // pred_check_branch
        %234 = sbr.rel (%p232) target = $region32
      $region31: #{down_forward.1} parent=11 // pred_region
        _
      $region32: #{down_forward.1} parent=11 // pred_fallthru
        _
      // Predicated region
      $region33: #{down_forward.1} parent=11 // pred_check
        %p235 = pneg %p177
      $region34: #{down_forward.1} parent=11 // pred_check_branch
        %237 = sbr.rel (%p235) target = $region36
      $region35: #{down_forward.1} parent=11 // pred_region
        _
      $region36: #{down_forward.1} parent=11 // pred_fallthru
        _
    $region12: #{down_forward.1} parent=5 // pred_fallthru
      _
    %p238 = scmp.lt.s32.totalorder %s13, 4
    // Predicated region
    $region37: #{down_forward.1} parent=5 // pred_check
      %p239 = pneg %p238
    $region38: #{down_forward.1} parent=5 // pred_check_branch
      %241 = sbr.rel (%p239) target = $region40
    $region39: #{down_forward.1} parent=5 // pred_region
      // Predicated region
      $region41: #{down_forward.1} parent=39 // pred_check
        %p242 = pneg %p45
      $region42: #{down_forward.1} parent=39 // pred_check_branch
        %244 = sbr.rel (%p242) target = $region44
      $region43: #{down_forward.1} parent=39 // pred_region
        %p245 = scmp.lt.s32.totalorder %s20, 1
        %s246 = scalar_select %p245, %s20, 1
        %s247 = smul.addr %s246, 48
        %s248 = smul.addr %s247, 4
        %s249 = scalar_lea.vmem %s0, %s248
      $region44: #{down_forward.1} parent=39 // pred_fallthru
        _
    $region40: #{down_forward.1} parent=5 // pred_fallthru
      _
    %p250 = scmp.le.s32.totalorder 1, %s13
    %p251 = scmp.lt.s32.totalorder %s13, 5
    %p252 = pnand %p250, %p251
    %p253 = pneg %p252
    // Predicated region
    $region45: #{down_forward.1} parent=5 // pred_check
      _
    $region46: #{down_forward.1} parent=5 // pred_check_branch
      %255 = sbr.rel (%p252) target = $region48
    $region47: #{down_forward.1} parent=5 // pred_region
      %s256 = ssub.s32 %s13, 1
      %p257 = scmp.lt.s32.totalorder %s22, 1
      %s258 = scalar_select %p257, %s22, 1
      %s259 = smul.addr %s258, 48
      %s260 = smul.addr %s259, 4
      %s261 = scalar_lea.vmem %s0, %s260
      %p262 = pneg %p51
      %p263 = pneg %p48
      %p264 = pneg %p72
      %p265 = pneg %p69
      %p266 = pneg %p93
      %p267 = pneg %p90
      %p268 = pneg %p114
      %p269 = pneg %p111
      %p270 = pneg %p135
      %p271 = pneg %p132
      %p272 = pneg %p156
      %p273 = pneg %p153
      %p274 = pneg %p177
      %p275 = pneg %p174
      %p276 = pneg %p205
      %p277 = pneg %p202
      %s278 = smul.u32 4, %s23
      %p279 = scmp.lt.s32.totalorder %s22, 1
      %s280 = scalar_select %p279, %s22, 1
      %p281 = scmp.lt.s32.totalorder %s278, 7
      %s282 = scalar_select %p281, %s278, 7
      %s283 = smul.addr %s280, 8
      %s284 = sadd.s32 %s282, %s283
      %s285 = smul.addr %s284, 8
      %s286 = scalar_lea.vmem %s7, %s285
      %p287 = scmp.lt.s32.totalorder %s22, 1
      %s288 = scalar_select %p287, %s22, 1
      %s289 = smul.addr %s288, 48
      %s290 = smul.addr %s289, 4
      %s291 = scalar_lea.vmem %s0, %s290
      %s292 = smul.u32 4, %s23
      %p293 = scmp.lt.s32.totalorder %s22, 1
      %s294 = scalar_select %p293, %s22, 1
      %p295 = scmp.lt.s32.totalorder %s292, 7
      %s296 = scalar_select %p295, %s292, 7
      %s297 = smul.addr %s294, 8
      %s298 = sadd.s32 %s296, %s297
      %s299 = smul.addr %s298, 8
      %s300 = scalar_lea.vmem %s7, %s299
      %s301 = smul.u32 4, %s23
      %s303 = smul.u32 %s23, 4
      %s304 = smul.u32 %s303, 4
      %s305 = smul.addr %s304, 4
      %s306 = scalar_lea.vmem %s291, %s305
      %v307 = vld [vmem:[%s306] sm:$0xff]
      %v308 = vld [vmem:[%s306 + $0x8] sm:$0xff]
      %v309 = vld [vmem:[%s306 + $0x10] sm:$0xff]
      %v310 = vld [vmem:[%s306 + $0x18] sm:$0xff]
      %v311 = vld [vmem:[%s306 + $0x20] sm:$0xff]
      %v312 = vld [vmem:[%s306 + $0x28] sm:$0xff]
      %v313 = vld [vmem:[%s306 + $0x30] sm:$0xff]
      %v314 = vld [vmem:[%s306 + $0x38] sm:$0xff]
      %v315 = vld [vmem:[%s306 + $0x40] sm:$0xff]
      %v316 = vld [vmem:[%s306 + $0x48] sm:$0xff]
      %v317 = vld [vmem:[%s306 + $0x50] sm:$0xff]
      %v318 = vld [vmem:[%s306 + $0x58] sm:$0xff]
      %v319 = vld [vmem:[%s306 + $0x60] sm:$0xff]
      %v320 = vld [vmem:[%s306 + $0x68] sm:$0xff]
      %v321 = vld [vmem:[%s306 + $0x70] sm:$0xff]
      %v322 = vld [vmem:[%s306 + $0x78] sm:$0xff]
      %v323 = vmax.bf16 %v307, %v308
      %v324 = vmax.bf16 %v309, %v310
      %v325 = vmax.bf16 %v311, %v312
      %v326 = vmax.bf16 %v313, %v314
      %v327 = vmax.bf16 %v315, %v316
      %v328 = vmax.bf16 %v317, %v318
      %v329 = vmax.bf16 %v319, %v320
      %v330 = vmax.bf16 %v321, %v322
      %v339 = vrot.slane %v323, 4
      %v340 = vrot.slane %v324, 4
      %v341 = vrot.slane %v325, 4
      %v342 = vrot.slane %v326, 4
      %v343 = vrot.slane %v327, 4
      %v344 = vrot.slane %v328, 4
      %v345 = vrot.slane %v329, 4
      %v346 = vrot.slane %v330, 4
      %v355 = vmax.bf16 %v323, %v339
      %v356 = vmax.bf16 %v324, %v340
      %v357 = vmax.bf16 %v325, %v341
      %v358 = vmax.bf16 %v326, %v342
      %v359 = vmax.bf16 %v327, %v343
      %v360 = vmax.bf16 %v328, %v344
      %v361 = vmax.bf16 %v329, %v345
      %v362 = vmax.bf16 %v330, %v346
      %v363 = vunpack.c.l.bf16 %v355
      %v364 = vunpack.c.l.bf16 %v356
      %v365 = vunpack.c.l.bf16 %v357
      %v366 = vunpack.c.l.bf16 %v358
      %v367 = vunpack.c.l.bf16 %v359
      %v368 = vunpack.c.l.bf16 %v360
      %v369 = vunpack.c.l.bf16 %v361
      %v370 = vunpack.c.l.bf16 %v362
      %v371 = vlaneseq
      %v372 = vshrl.u32 %v371, 7
      %v373 = vadd.s32 %v372, 8
      %v374 = vadd.s32 %v372, 16
      %v375 = vadd.s32 %v372, 24
      %v376 = vadd.s32 %v372, 32
      %v377 = vadd.s32 %v372, 40
      %v378 = vand.u32 %v372, 7
      %v379 = vand.u32 %v373, 7
      %v380 = vand.u32 %v374, 7
      %v381 = vand.u32 %v375, 7
      %v382 = vand.u32 %v376, 7
      %v383 = vand.u32 %v377, 7
      %vm384 = vcmp.ge.s32.totalorder %v378, 1
      %vm385 = vcmp.ge.s32.totalorder %v379, 1
      %vm386 = vcmp.ge.s32.totalorder %v380, 1
      %vm387 = vcmp.ge.s32.totalorder %v381, 1
      %vm388 = vcmp.ge.s32.totalorder %v382, 1
      %vm389 = vcmp.ge.s32.totalorder %v383, 1
      %vm390 = vcmp.le.s32.totalorder %v378, 6
      %vm391 = vcmp.le.s32.totalorder %v379, 6
      %vm392 = vcmp.le.s32.totalorder %v380, 6
      %vm393 = vcmp.le.s32.totalorder %v381, 6
      %vm394 = vcmp.le.s32.totalorder %v382, 6
      %vm395 = vcmp.le.s32.totalorder %v383, 6
      %v396 = vrot.slane %v363, 7
      %v397 = vrot.slane %v364, 7
      %v398 = vrot.slane %v365, 7
      %v399 = vrot.slane %v366, 7
      %v400 = vrot.slane %v367, 7
      %v401 = vrot.slane %v368, 7
      %v402 = vrot.slane %v370, 7
      %vm403 = vcmp.lt.s32.totalorder %v372, 1
      %v404 = vsel %vm403, %v400, %v401
      %v405 = vsel %vm403, %v399, %v400
      %v406 = vsel %vm403, %v398, %v399
      %v407 = vsel %vm403, %v397, %v398
      %v408 = vsel %vm403, %v396, %v397
      %v409 = vsel %vm403, %v402, %v396
      %v410 = vsel %vm384, 1, 0
      %v411 = vsel %vm385, 1, 0
      %v412 = vsel %vm386, 1, 0
      %v413 = vsel %vm387, 1, 0
      %v414 = vsel %vm388, 1, 0
      %v415 = vsel %vm389, 1, 0
      %vm416 = vcmp.eq.s32.totalorder %v410, 1
      %vm417 = vcmp.eq.s32.totalorder %v411, 1
      %vm418 = vcmp.eq.s32.totalorder %v412, 1
      %vm419 = vcmp.eq.s32.totalorder %v413, 1
      %vm420 = vcmp.eq.s32.totalorder %v414, 1
      %vm421 = vcmp.eq.s32.totalorder %v415, 1
      %v422 = vsel %vm416, %v409, 0.0
      %v423 = vsel %vm417, %v408, 0.0
      %v424 = vsel %vm418, %v407, 0.0
      %v425 = vsel %vm419, %v406, 0.0
      %v426 = vsel %vm420, %v405, 0.0
      %v427 = vsel %vm421, %v404, 0.0
      %v428 = vpack.c.bf16 %v423, %v422
      %v429 = vpack.c.bf16 %v425, %v424
      %v430 = vpack.c.bf16 %v427, %v426
      %v431 = vpack.c.bf16 %v364, %v363
      %v432 = vpack.c.bf16 %v366, %v365
      %v433 = vpack.c.bf16 %v368, %v367
      %v434 = vrot.slane %v363, 1
      %v435 = vrot.slane %v364, 1
      %v436 = vrot.slane %v365, 1
      %v437 = vrot.slane %v366, 1
      %v438 = vrot.slane %v367, 1
      %v439 = vrot.slane %v368, 1
      %v440 = vrot.slane %v369, 1
      %vm441 = vcmp.lt.s32.totalorder %v372, 7
      %v442 = vsel %vm441, %v439, %v440
      %v443 = vsel %vm441, %v438, %v439
      %v444 = vsel %vm441, %v437, %v438
      %v445 = vsel %vm441, %v436, %v437
      %v446 = vsel %vm441, %v435, %v436
      %v447 = vsel %vm441, %v434, %v435
      %v448 = vsel %vm390, 1, 0
      %v449 = vsel %vm391, 1, 0
      %v450 = vsel %vm392, 1, 0
      %v451 = vsel %vm393, 1, 0
      %v452 = vsel %vm394, 1, 0
      %v453 = vsel %vm395, 1, 0
      %vm454 = vcmp.eq.s32.totalorder %v448, 1
      %vm455 = vcmp.eq.s32.totalorder %v449, 1
      %vm456 = vcmp.eq.s32.totalorder %v450, 1
      %vm457 = vcmp.eq.s32.totalorder %v451, 1
      %vm458 = vcmp.eq.s32.totalorder %v452, 1
      %vm459 = vcmp.eq.s32.totalorder %v453, 1
      %v460 = vsel %vm454, %v447, 0.0
      %v461 = vsel %vm455, %v446, 0.0
      %v462 = vsel %vm456, %v445, 0.0
      %v463 = vsel %vm457, %v444, 0.0
      %v464 = vsel %vm458, %v443, 0.0
      %v465 = vsel %vm459, %v442, 0.0
      %v466 = vpack.c.bf16 %v461, %v460
      %v467 = vpack.c.bf16 %v463, %v462
      %v468 = vpack.c.bf16 %v465, %v464
      %v469 = vrot.slane %v369, 7
      %v470 = vsel %vm403, %v401, %v469
      %v471 = vsel %vm416, %v408, 0.0
      %v472 = vsel %vm417, %v407, 0.0
      %v473 = vsel %vm418, %v406, 0.0
      %v474 = vsel %vm419, %v405, 0.0
      %v475 = vsel %vm420, %v404, 0.0
      %v476 = vsel %vm421, %v470, 0.0
      %v477 = vpack.c.bf16 %v472, %v471
      %v478 = vpack.c.bf16 %v474, %v473
      %v479 = vpack.c.bf16 %v476, %v475
      %v480 = vpack.c.bf16 %v365, %v364
      %v481 = vpack.c.bf16 %v367, %v366
      %v482 = vpack.c.bf16 %v369, %v368
      %v483 = vrot.slane %v370, 1
      %v484 = vsel %vm441, %v440, %v483
      %v485 = vsel %vm454, %v446, 0.0
      %v486 = vsel %vm455, %v445, 0.0
      %v487 = vsel %vm456, %v444, 0.0
      %v488 = vsel %vm457, %v443, 0.0
      %v489 = vsel %vm458, %v442, 0.0
      %v490 = vsel %vm459, %v484, 0.0
      %v491 = vpack.c.bf16 %v486, %v485
      %v492 = vpack.c.bf16 %v488, %v487
      %v493 = vpack.c.bf16 %v490, %v489
      %v494 = vsel %vm403, %v469, %v402
      %v495 = vsel %vm416, %v407, 0.0
      %v496 = vsel %vm417, %v406, 0.0
      %v497 = vsel %vm418, %v405, 0.0
      %v498 = vsel %vm419, %v404, 0.0
      %v499 = vsel %vm420, %v470, 0.0
      %v500 = vsel %vm421, %v494, 0.0
      %v501 = vpack.c.bf16 %v496, %v495
      %v502 = vpack.c.bf16 %v498, %v497
      %v503 = vpack.c.bf16 %v500, %v499
      %v504 = vpack.c.bf16 %v370, %v369
      %v505 = vsel %vm441, %v483, %v434
      %v506 = vsel %vm454, %v445, 0.0
      %v507 = vsel %vm455, %v444, 0.0
      %v508 = vsel %vm456, %v443, 0.0
      %v509 = vsel %vm457, %v442, 0.0
      %v510 = vsel %vm458, %v484, 0.0
      %v511 = vsel %vm459, %v505, 0.0
      %v512 = vpack.c.bf16 %v507, %v506
      %v513 = vpack.c.bf16 %v509, %v508
      %v514 = vpack.c.bf16 %v511, %v510
      %v515 = vld [vmem:[%s1] sm:$0xf]
      %v516 = vld [vmem:[%s1 + $0x4] sm:$0xf]
      %v517 = vld [vmem:[%s1 + $0x8] sm:$0xf]
      %v518 = vld [vmem:[%s1 + $0xc] sm:$0xf]
      %v519 = vld [vmem:[%s1 + $0x10] sm:$0xf]
      %v520 = vld [vmem:[%s1 + $0x14] sm:$0xf]
      %v521 = vld [vmem:[%s1 + $0x18] sm:$0xf]
      %v522 = vld [vmem:[%s1 + $0x1c] sm:$0xf]
      %v523 = vld [vmem:[%s1 + $0x20] sm:$0xf]
      %v524 = vld [vmem:[%s1 + $0x24] sm:$0xf]
      %v525 = vld [vmem:[%s1 + $0x28] sm:$0xf]
      %v526 = vld [vmem:[%s1 + $0x2c] sm:$0xf]
      %v527 = vld [vmem:[%s1 + $0x30] sm:$0xf]
      %v528 = vld [vmem:[%s1 + $0x34] sm:$0xf]
      %v529 = vld [vmem:[%s1 + $0x38] sm:$0xf]
      %v530 = vld [vmem:[%s1 + $0x3c] sm:$0xf]
      %v531 = vld [vmem:[%s1 + $0x40] sm:$0xf]
      %v532 = vld [vmem:[%s1 + $0x44] sm:$0xf]
      %v533 = vld [vmem:[%s1 + $0x48] sm:$0xf]
      %v534 = vld [vmem:[%s1 + $0x4c] sm:$0xf]
      %v535 = vld [vmem:[%s1 + $0x50] sm:$0xf]
      %v536 = vld [vmem:[%s1 + $0x54] sm:$0xf]
      %v537 = vld [vmem:[%s1 + $0x58] sm:$0xf]
      %v538 = vld [vmem:[%s1 + $0x5c] sm:$0xf]
      %v539 = vld [vmem:[%s1 + $0x60] sm:$0xf]
      %v540 = vld [vmem:[%s1 + $0x64] sm:$0xf]
      %v541 = vld [vmem:[%s1 + $0x68] sm:$0xf]
      %v542 = vld [vmem:[%s1 + $0x6c] sm:$0xf]
      %v543 = vld [vmem:[%s1 + $0x70] sm:$0xf]
      %v544 = vld [vmem:[%s1 + $0x74] sm:$0xf]
      %v545 = vld [vmem:[%s1 + $0x78] sm:$0xf]
      %v546 = vld [vmem:[%s1 + $0x7c] sm:$0xf]
      %v547 = vld [vmem:[%s1 + $0x80] sm:$0xf]
      %v548 = vld [vmem:[%s1 + $0x84] sm:$0xf]
      %v549 = vld [vmem:[%s1 + $0x88] sm:$0xf]
      %v550 = vld [vmem:[%s1 + $0x8c] sm:$0xf]
      %v551 = vld [vmem:[%s1 + $0x90] sm:$0xf]
      %v552 = vld [vmem:[%s1 + $0x94] sm:$0xf]
      %v553 = vld [vmem:[%s1 + $0x98] sm:$0xf]
      %v554 = vld [vmem:[%s1 + $0x9c] sm:$0xf]
      %v555 = vld [vmem:[%s1 + $0xa0] sm:$0xf]
      %v556 = vld [vmem:[%s1 + $0xa4] sm:$0xf]
      %v557 = vld [vmem:[%s1 + $0xa8] sm:$0xf]
      %v558 = vld [vmem:[%s1 + $0xac] sm:$0xf]
      %v559 = vld [vmem:[%s1 + $0xb0] sm:$0xf]
      %v560 = vld [vmem:[%s1 + $0xb4] sm:$0xf]
      %v561 = vld [vmem:[%s1 + $0xb8] sm:$0xf]
      %v562 = vld [vmem:[%s1 + $0xbc] sm:$0xf]
      %v563 = vld [vmem:[%s1 + $0xc0] sm:$0xf]
      %v564 = vld [vmem:[%s1 + $0xc4] sm:$0xf]
      %v565 = vld [vmem:[%s1 + $0xc8] sm:$0xf]
      %v566 = vld [vmem:[%s1 + $0xcc] sm:$0xf]
      %v567 = vld [vmem:[%s1 + $0xd0] sm:$0xf]
      %v568 = vld [vmem:[%s1 + $0xd4] sm:$0xf]
      %v569 = vld [vmem:[%s1 + $0xd8] sm:$0xf]
      %v570 = vld [vmem:[%s1 + $0xdc] sm:$0xf]
      %v571 = vld [vmem:[%s1 + $0xe0] sm:$0xf]
      %v572 = vld [vmem:[%s1 + $0xe4] sm:$0xf]
      %v573 = vld [vmem:[%s1 + $0xe8] sm:$0xf]
      %v574 = vld [vmem:[%s1 + $0xec] sm:$0xf]
      %v575 = vld [vmem:[%s1 + $0xf0] sm:$0xf]
      %v576 = vld [vmem:[%s1 + $0xf4] sm:$0xf]
      %v577 = vld [vmem:[%s1 + $0xf8] sm:$0xf]
      %v578 = vld [vmem:[%s1 + $0xfc] sm:$0xf]
      %v579 = vld [vmem:[%s1 + $0x100] sm:$0xf]
      %v580 = vld [vmem:[%s1 + $0x104] sm:$0xf]
      %v581 = vld [vmem:[%s1 + $0x108] sm:$0xf]
      %v582 = vld [vmem:[%s1 + $0x10c] sm:$0xf]
      %v583 = vld [vmem:[%s1 + $0x110] sm:$0xf]
      %v584 = vld [vmem:[%s1 + $0x114] sm:$0xf]
      %v585 = vld [vmem:[%s1 + $0x118] sm:$0xf]
      %v586 = vld [vmem:[%s1 + $0x11c] sm:$0xf]
      %v587 = vld [vmem:[%s1 + $0x120] sm:$0xf]
      %v588 = vld [vmem:[%s1 + $0x124] sm:$0xf]
      %v589 = vld [vmem:[%s1 + $0x128] sm:$0xf]
      %v590 = vld [vmem:[%s1 + $0x12c] sm:$0xf]
      %v591 = vld [vmem:[%s1 + $0x130] sm:$0xf]
      %v592 = vld [vmem:[%s1 + $0x134] sm:$0xf]
      %v593 = vld [vmem:[%s1 + $0x138] sm:$0xf]
      %v594 = vld [vmem:[%s1 + $0x13c] sm:$0xf]
      %v595 = vld [vmem:[%s1 + $0x140] sm:$0xf]
      %v596 = vld [vmem:[%s1 + $0x144] sm:$0xf]
      %v597 = vld [vmem:[%s1 + $0x148] sm:$0xf]
      %v598 = vld [vmem:[%s1 + $0x14c] sm:$0xf]
      %v599 = vld [vmem:[%s1 + $0x150] sm:$0xf]
      %v600 = vld [vmem:[%s1 + $0x154] sm:$0xf]
      %v601 = vld [vmem:[%s1 + $0x158] sm:$0xf]
      %v602 = vld [vmem:[%s1 + $0x15c] sm:$0xf]
      %v603 = vld [vmem:[%s1 + $0x160] sm:$0xf]
      %v604 = vld [vmem:[%s1 + $0x164] sm:$0xf]
      %v605 = vld [vmem:[%s1 + $0x168] sm:$0xf]
      %v606 = vld [vmem:[%s1 + $0x16c] sm:$0xf]
      %v607 = vld [vmem:[%s1 + $0x170] sm:$0xf]
      %v608 = vld [vmem:[%s1 + $0x174] sm:$0xf]
      %v609 = vld [vmem:[%s1 + $0x178] sm:$0xf]
      %v610 = vld [vmem:[%s1 + $0x17c] sm:$0xf]
      %v611 = vld [vmem:[%s1 + $0x180] sm:$0xf]
      %v612 = vld [vmem:[%s1 + $0x184] sm:$0xf]
      %v613 = vld [vmem:[%s1 + $0x188] sm:$0xf]
      %v614 = vld [vmem:[%s1 + $0x18c] sm:$0xf]
      %v615 = vld [vmem:[%s1 + $0x190] sm:$0xf]
      %v616 = vld [vmem:[%s1 + $0x194] sm:$0xf]
      %v617 = vld [vmem:[%s1 + $0x198] sm:$0xf]
      %v618 = vld [vmem:[%s1 + $0x19c] sm:$0xf]
      %v619 = vld [vmem:[%s1 + $0x1a0] sm:$0xf]
      %v620 = vld [vmem:[%s1 + $0x1a4] sm:$0xf]
      %v621 = vld [vmem:[%s1 + $0x1a8] sm:$0xf]
      %v622 = vld [vmem:[%s1 + $0x1ac] sm:$0xf]
      %v623 = vld [vmem:[%s1 + $0x1b0] sm:$0xf]
      %v624 = vld [vmem:[%s1 + $0x1b4] sm:$0xf]
      %v625 = vld [vmem:[%s1 + $0x1b8] sm:$0xf]
      %v626 = vld [vmem:[%s1 + $0x1bc] sm:$0xf]
      %v627 = vld [vmem:[%s1 + $0x1c0] sm:$0xf]
      %v628 = vld [vmem:[%s1 + $0x1c4] sm:$0xf]
      %v629 = vld [vmem:[%s1 + $0x1c8] sm:$0xf]
      %v630 = vld [vmem:[%s1 + $0x1cc] sm:$0xf]
      %v631 = vld [vmem:[%s1 + $0x1d0] sm:$0xf]
      %v632 = vld [vmem:[%s1 + $0x1d4] sm:$0xf]
      %v633 = vld [vmem:[%s1 + $0x1d8] sm:$0xf]
      %v634 = vld [vmem:[%s1 + $0x1dc] sm:$0xf]
      %v635 = vld [vmem:[%s1 + $0x1e0] sm:$0xf]
      %v636 = vld [vmem:[%s1 + $0x1e4] sm:$0xf]
      %v637 = vld [vmem:[%s1 + $0x1e8] sm:$0xf]
      %v638 = vld [vmem:[%s1 + $0x1ec] sm:$0xf]
      %v639 = vld [vmem:[%s1 + $0x1f0] sm:$0xf]
      %v640 = vld [vmem:[%s1 + $0x1f4] sm:$0xf]
      %v641 = vld [vmem:[%s1 + $0x1f8] sm:$0xf]
      %v642 = vld [vmem:[%s1 + $0x1fc] sm:$0xf]
      %v643 = vld [vmem:[%s1 + $0x200] sm:$0xf]
      %v644 = vld [vmem:[%s1 + $0x204] sm:$0xf]
      %v645 = vld [vmem:[%s1 + $0x208] sm:$0xf]
      %v646 = vld [vmem:[%s1 + $0x20c] sm:$0xf]
      %v647 = vld [vmem:[%s1 + $0x210] sm:$0xf]
      %v648 = vld [vmem:[%s1 + $0x214] sm:$0xf]
      %v649 = vld [vmem:[%s1 + $0x218] sm:$0xf]
      %v650 = vld [vmem:[%s1 + $0x21c] sm:$0xf]
      %v651 = vld [vmem:[%s1 + $0x220] sm:$0xf]
      %v652 = vld [vmem:[%s1 + $0x224] sm:$0xf]
      %v653 = vld [vmem:[%s1 + $0x228] sm:$0xf]
      %v654 = vld [vmem:[%s1 + $0x22c] sm:$0xf]
      %v655 = vld [vmem:[%s1 + $0x230] sm:$0xf]
      %v656 = vld [vmem:[%s1 + $0x234] sm:$0xf]
      %v657 = vld [vmem:[%s1 + $0x238] sm:$0xf]
      %v658 = vld [vmem:[%s1 + $0x23c] sm:$0xf]
      %v803 = vunpack.c.l.b16 %v515
      %v804 = vunpack.c.l.b16 %v516
      %v805 = vunpack.c.l.b16 %v517
      %v806 = vunpack.c.l.b16 %v518
      %v807 = vunpack.c.l.b16 %v519
      %v808 = vunpack.c.l.b16 %v520
      %v809 = vunpack.c.l.b16 %v521
      %v810 = vunpack.c.l.b16 %v522
      %v811 = vunpack.c.l.b16 %v523
      %v812 = vunpack.c.l.b16 %v524
      %v813 = vunpack.c.l.b16 %v525
      %v814 = vunpack.c.l.b16 %v526
      %v815 = vunpack.c.l.b16 %v527
      %v816 = vunpack.c.l.b16 %v528
      %v817 = vunpack.c.l.b16 %v529
      %v818 = vunpack.c.l.b16 %v530
      %v819 = vunpack.c.l.b16 %v531
      %v820 = vunpack.c.l.b16 %v532
      %v821 = vunpack.c.l.b16 %v533
      %v822 = vunpack.c.l.b16 %v534
      %v823 = vunpack.c.l.b16 %v535
      %v824 = vunpack.c.l.b16 %v536
      %v825 = vunpack.c.l.b16 %v537
      %v826 = vunpack.c.l.b16 %v538
      %v827 = vunpack.c.l.b16 %v539
      %v828 = vunpack.c.l.b16 %v540
      %v829 = vunpack.c.l.b16 %v541
      %v830 = vunpack.c.l.b16 %v542
      %v831 = vunpack.c.l.b16 %v543
      %v832 = vunpack.c.l.b16 %v544
      %v833 = vunpack.c.l.b16 %v545
      %v834 = vunpack.c.l.b16 %v546
      %v835 = vunpack.c.l.b16 %v547
      %v836 = vunpack.c.l.b16 %v548
      %v837 = vunpack.c.l.b16 %v549
      %v838 = vunpack.c.l.b16 %v550
      %v839 = vunpack.c.l.b16 %v551
      %v840 = vunpack.c.l.b16 %v552
      %v841 = vunpack.c.l.b16 %v553
      %v842 = vunpack.c.l.b16 %v554
      %v843 = vunpack.c.l.b16 %v555
      %v844 = vunpack.c.l.b16 %v556
      %v845 = vunpack.c.l.b16 %v557
      %v846 = vunpack.c.l.b16 %v558
      %v847 = vunpack.c.l.b16 %v559
      %v848 = vunpack.c.l.b16 %v560
      %v849 = vunpack.c.l.b16 %v561
      %v850 = vunpack.c.l.b16 %v562
      %v851 = vunpack.c.l.b16 %v563
      %v852 = vunpack.c.l.b16 %v564
      %v853 = vunpack.c.l.b16 %v565
      %v854 = vunpack.c.l.b16 %v566
      %v855 = vunpack.c.l.b16 %v567
      %v856 = vunpack.c.l.b16 %v568
      %v857 = vunpack.c.l.b16 %v569
      %v858 = vunpack.c.l.b16 %v570
      %v859 = vunpack.c.l.b16 %v571
      %v860 = vunpack.c.l.b16 %v572
      %v861 = vunpack.c.l.b16 %v573
      %v862 = vunpack.c.l.b16 %v574
      %v863 = vunpack.c.l.b16 %v575
      %v864 = vunpack.c.l.b16 %v576
      %v865 = vunpack.c.l.b16 %v577
      %v866 = vunpack.c.l.b16 %v578
      %v867 = vunpack.c.l.b16 %v579
      %v868 = vunpack.c.l.b16 %v580
      %v869 = vunpack.c.l.b16 %v581
      %v870 = vunpack.c.l.b16 %v582
      %v871 = vunpack.c.l.b16 %v583
      %v872 = vunpack.c.l.b16 %v584
      %v873 = vunpack.c.l.b16 %v585
      %v874 = vunpack.c.l.b16 %v586
      %v875 = vunpack.c.l.b16 %v587
      %v876 = vunpack.c.l.b16 %v588
      %v877 = vunpack.c.l.b16 %v589
      %v878 = vunpack.c.l.b16 %v590
      %v879 = vunpack.c.l.b16 %v591
      %v880 = vunpack.c.l.b16 %v592
      %v881 = vunpack.c.l.b16 %v593
      %v882 = vunpack.c.l.b16 %v594
      %v883 = vunpack.c.l.b16 %v595
      %v884 = vunpack.c.l.b16 %v596
      %v885 = vunpack.c.l.b16 %v597
      %v886 = vunpack.c.l.b16 %v598
      %v887 = vunpack.c.l.b16 %v599
      %v888 = vunpack.c.l.b16 %v600
      %v889 = vunpack.c.l.b16 %v601
      %v890 = vunpack.c.l.b16 %v602
      %v891 = vunpack.c.l.b16 %v603
      %v892 = vunpack.c.l.b16 %v604
      %v893 = vunpack.c.l.b16 %v605
      %v894 = vunpack.c.l.b16 %v606
      %v895 = vunpack.c.l.b16 %v607
      %v896 = vunpack.c.l.b16 %v608
      %v897 = vunpack.c.l.b16 %v609
      %v898 = vunpack.c.l.b16 %v610
      %v899 = vunpack.c.l.b16 %v611
      %v900 = vunpack.c.l.b16 %v612
      %v901 = vunpack.c.l.b16 %v613
      %v902 = vunpack.c.l.b16 %v614
      %v903 = vunpack.c.l.b16 %v615
      %v904 = vunpack.c.l.b16 %v616
      %v905 = vunpack.c.l.b16 %v617
      %v906 = vunpack.c.l.b16 %v618
      %v907 = vunpack.c.l.b16 %v619
      %v908 = vunpack.c.l.b16 %v620
      %v909 = vunpack.c.l.b16 %v621
      %v910 = vunpack.c.l.b16 %v622
      %v911 = vunpack.c.l.b16 %v623
      %v912 = vunpack.c.l.b16 %v624
      %v913 = vunpack.c.l.b16 %v625
      %v914 = vunpack.c.l.b16 %v626
      %v915 = vunpack.c.l.b16 %v627
      %v916 = vunpack.c.l.b16 %v628
      %v917 = vunpack.c.l.b16 %v629
      %v918 = vunpack.c.l.b16 %v630
      %v919 = vunpack.c.l.b16 %v631
      %v920 = vunpack.c.l.b16 %v632
      %v921 = vunpack.c.l.b16 %v633
      %v922 = vunpack.c.l.b16 %v634
      %v923 = vunpack.c.l.b16 %v635
      %v924 = vunpack.c.l.b16 %v636
      %v925 = vunpack.c.l.b16 %v637
      %v926 = vunpack.c.l.b16 %v638
      %v927 = vunpack.c.l.b16 %v639
      %v928 = vunpack.c.l.b16 %v640
      %v929 = vunpack.c.l.b16 %v641
      %v930 = vunpack.c.l.b16 %v642
      %v931 = vunpack.c.l.b16 %v643
      %v932 = vunpack.c.l.b16 %v644
      %v933 = vunpack.c.l.b16 %v645
      %v934 = vunpack.c.l.b16 %v646
      %v935 = vunpack.c.l.b16 %v647
      %v936 = vunpack.c.l.b16 %v648
      %v937 = vunpack.c.l.b16 %v649
      %v938 = vunpack.c.l.b16 %v650
      %v939 = vunpack.c.l.b16 %v651
      %v940 = vunpack.c.l.b16 %v652
      %v941 = vunpack.c.l.b16 %v653
      %v942 = vunpack.c.l.b16 %v654
      %v943 = vunpack.c.l.b16 %v655
      %v944 = vunpack.c.l.b16 %v656
      %v945 = vunpack.c.l.b16 %v657
      %v946 = vunpack.c.l.b16 %v658
      %v947 = vpack.c.b16 %v804, %v803
      %v948 = vpack.c.b16 %v806, %v805
      %v949 = vpack.c.b16 %v808, %v807
      %v950 = vpack.c.b16 %v810, %v809
      %v951 = vpack.c.b16 %v812, %v811
      %v952 = vpack.c.b16 %v814, %v813
      %v953 = vpack.c.b16 %v816, %v815
      %v954 = vpack.c.b16 %v818, %v817
      %v955 = vpack.c.b16 %v820, %v819
      %v956 = vpack.c.b16 %v822, %v821
      %v957 = vpack.c.b16 %v824, %v823
      %v958 = vpack.c.b16 %v826, %v825
      %v959 = vpack.c.b16 %v828, %v827
      %v960 = vpack.c.b16 %v830, %v829
      %v961 = vpack.c.b16 %v832, %v831
      %v962 = vpack.c.b16 %v834, %v833
      %v963 = vpack.c.b16 %v836, %v835
      %v964 = vpack.c.b16 %v838, %v837
      %v965 = vpack.c.b16 %v840, %v839
      %v966 = vpack.c.b16 %v842, %v841
      %v967 = vpack.c.b16 %v844, %v843
      %v968 = vpack.c.b16 %v846, %v845
      %v969 = vpack.c.b16 %v848, %v847
      %v970 = vpack.c.b16 %v850, %v849
      %v971 = vpack.c.b16 %v852, %v851
      %v972 = vpack.c.b16 %v854, %v853
      %v973 = vpack.c.b16 %v856, %v855
      %v974 = vpack.c.b16 %v858, %v857
      %v975 = vpack.c.b16 %v860, %v859
      %v976 = vpack.c.b16 %v862, %v861
      %v977 = vpack.c.b16 %v864, %v863
      %v978 = vpack.c.b16 %v866, %v865
      %v979 = vpack.c.b16 %v868, %v867
      %v980 = vpack.c.b16 %v870, %v869
      %v981 = vpack.c.b16 %v872, %v871
      %v982 = vpack.c.b16 %v874, %v873
      %v983 = vpack.c.b16 %v876, %v875
      %v984 = vpack.c.b16 %v878, %v877
      %v985 = vpack.c.b16 %v880, %v879
      %v986 = vpack.c.b16 %v882, %v881
      %v987 = vpack.c.b16 %v884, %v883
      %v988 = vpack.c.b16 %v886, %v885
      %v989 = vpack.c.b16 %v888, %v887
      %v990 = vpack.c.b16 %v890, %v889
      %v991 = vpack.c.b16 %v892, %v891
      %v992 = vpack.c.b16 %v894, %v893
      %v993 = vpack.c.b16 %v896, %v895
      %v994 = vpack.c.b16 %v898, %v897
      %v995 = vpack.c.b16 %v900, %v899
      %v996 = vpack.c.b16 %v902, %v901
      %v997 = vpack.c.b16 %v904, %v903
      %v998 = vpack.c.b16 %v906, %v905
      %v999 = vpack.c.b16 %v908, %v907
      %v1000 = vpack.c.b16 %v910, %v909
      %v1001 = vpack.c.b16 %v912, %v911
      %v1002 = vpack.c.b16 %v914, %v913
      %v1003 = vpack.c.b16 %v916, %v915
      %v1004 = vpack.c.b16 %v918, %v917
      %v1005 = vpack.c.b16 %v920, %v919
      %v1006 = vpack.c.b16 %v922, %v921
      %v1007 = vpack.c.b16 %v924, %v923
      %v1008 = vpack.c.b16 %v926, %v925
      %v1009 = vpack.c.b16 %v928, %v927
      %v1010 = vpack.c.b16 %v930, %v929
      %v1011 = vpack.c.b16 %v932, %v931
      %v1012 = vpack.c.b16 %v934, %v933
      %v1013 = vpack.c.b16 %v936, %v935
      %v1014 = vpack.c.b16 %v938, %v937
      %v1015 = vpack.c.b16 %v940, %v939
      %v1016 = vpack.c.b16 %v942, %v941
      %v1017 = vpack.c.b16 %v944, %v943
      %v1018 = vpack.c.b16 %v946, %v945
      %1091 = vmatprep.subr.bf16.mxu0 0
      %1092 = vmatpush1.bf16.msra.mxu0 %v954
      %1093 = vmatprep.subr.bf16.mxu0 0
      %1094 = vmatpush1.bf16.msra.mxu0 %v953
      %1095 = vmatprep.subr.bf16.mxu0 0
      %1096 = vmatpush1.bf16.msra.mxu0 %v952
      %1097 = vmatprep.subr.bf16.mxu0 0
      %1098 = vmatpush1.bf16.msra.mxu0 %v951
      %1099 = vmatprep.subr.bf16.mxu0 0
      %1100 = vmatpush1.bf16.msra.mxu0 %v950
      %1101 = vmatprep.subr.bf16.mxu0 0
      %1102 = vmatpush1.bf16.msra.mxu0 %v949
      %1103 = vmatprep.subr.bf16.mxu0 0
      %1104 = vmatpush1.bf16.msra.mxu0 %v948
      %1105 = vmatprep.subr.bf16.mxu0 0
      %1106 = vmatpush1.bf16.msra.mxu0 %v947
      %1107 = vmatprep.subr.bf16.mxu0 0
      %1108 = vmatpush2.bf16.msra.mxu0 %v962
      %1109 = vmatprep.subr.bf16.mxu0 0
      %1110 = vmatpush2.bf16.msra.mxu0 %v961
      %1111 = vmatprep.subr.bf16.mxu0 0
      %1112 = vmatpush2.bf16.msra.mxu0 %v960
      %1113 = vmatprep.subr.bf16.mxu0 0
      %1114 = vmatpush2.bf16.msra.mxu0 %v959
      %1115 = vmatprep.subr.bf16.mxu0 0
      %1116 = vmatpush2.bf16.msra.mxu0 %v958
      %1117 = vmatprep.subr.bf16.mxu0 0
      %1118 = vmatpush2.bf16.msra.mxu0 %v957
      %1119 = vmatprep.subr.bf16.mxu0 0
      %1120 = vmatpush2.bf16.msra.mxu0 %v956
      %1121 = vmatprep.subr.bf16.mxu0 0
      %1122 = vmatpush2.bf16.msra.mxu0 %v955
      %1123 = vmatprep.mubr.bf16.mxu0 %v431
      %1124 = vmatmul.mubr.bf16.gmra.mxu0 %v428
      %v1125 = vpop.f32.mrf.mxu0
      %v1126 = vadd.f32 0.0, %v1125
      %v1127 = vpop.f32.mrf.mxu0
      %v1128 = vpop.f32.mrf.mxu0
      %v1129 = vadd.f32 0.0, %v1128
      %v1130 = vpop.f32.mrf.mxu0
      %1131 = vmatprep.mubr.bf16.mxu0 %v432
      %1132 = vmatmul.mubr.bf16.gmra.mxu0 %v429
      %v1133 = vpop.f32.mrf.mxu0
      %v1134 = vadd.f32 0.0, %v1133
      %v1135 = vpop.f32.mrf.mxu0
      %v1136 = vpop.f32.mrf.mxu0
      %v1137 = vadd.f32 0.0, %v1136
      %v1138 = vpop.f32.mrf.mxu0
      %1139 = vmatprep.mubr.bf16.mxu0 %v433
      %1140 = vmatmul.mubr.bf16.gmra.mxu0 %v430
      %v1141 = vpop.f32.mrf.mxu0
      %v1142 = vadd.f32 0.0, %v1141
      %v1143 = vpop.f32.mrf.mxu0
      %v1144 = vpop.f32.mrf.mxu0
      %v1145 = vadd.f32 0.0, %v1144
      %v1146 = vpop.f32.mrf.mxu0
      %1147 = vdwg.mxu0
      %1148 = vmatprep.subr.bf16.mxu0 0
      %1149 = vmatpush1.bf16.msra.mxu0 %v970
      %1150 = vmatprep.subr.bf16.mxu0 0
      %1151 = vmatpush1.bf16.msra.mxu0 %v969
      %1152 = vmatprep.subr.bf16.mxu0 0
      %1153 = vmatpush1.bf16.msra.mxu0 %v968
      %1154 = vmatprep.subr.bf16.mxu0 0
      %1155 = vmatpush1.bf16.msra.mxu0 %v967
      %1156 = vmatprep.subr.bf16.mxu0 0
      %1157 = vmatpush1.bf16.msra.mxu0 %v966
      %1158 = vmatprep.subr.bf16.mxu0 0
      %1159 = vmatpush1.bf16.msra.mxu0 %v965
      %1160 = vmatprep.subr.bf16.mxu0 0
      %1161 = vmatpush1.bf16.msra.mxu0 %v964
      %1162 = vmatprep.subr.bf16.mxu0 0
      %1163 = vmatpush1.bf16.msra.mxu0 %v963
      %1164 = vmatprep.subr.bf16.mxu0 0
      %1165 = vmatpush2.bf16.msra.mxu0 %v978
      %1166 = vmatprep.subr.bf16.mxu0 0
      %1167 = vmatpush2.bf16.msra.mxu0 %v977
      %1168 = vmatprep.subr.bf16.mxu0 0
      %1169 = vmatpush2.bf16.msra.mxu0 %v976
      %1170 = vmatprep.subr.bf16.mxu0 0
      %1171 = vmatpush2.bf16.msra.mxu0 %v975
      %1172 = vmatprep.subr.bf16.mxu0 0
      %1173 = vmatpush2.bf16.msra.mxu0 %v974
      %1174 = vmatprep.subr.bf16.mxu0 0
      %1175 = vmatpush2.bf16.msra.mxu0 %v973
      %1176 = vmatprep.subr.bf16.mxu0 0
      %1177 = vmatpush2.bf16.msra.mxu0 %v972
      %1178 = vmatprep.subr.bf16.mxu0 0
      %1179 = vmatpush2.bf16.msra.mxu0 %v971
      %1180 = vmatprep.mubr.bf16.mxu0 %v477
      %1181 = vmatmul.mubr.bf16.gmra.mxu0 %v466
      %v1182 = vpop.f32.mrf.mxu0
      %v1183 = vadd.f32 %v1126, %v1182
      %v1184 = vpop.f32.mrf.mxu0
      %v1185 = vpop.f32.mrf.mxu0
      %v1186 = vadd.f32 %v1129, %v1185
      %v1187 = vpop.f32.mrf.mxu0
      %1188 = vmatprep.mubr.bf16.mxu0 %v478
      %1189 = vmatmul.mubr.bf16.gmra.mxu0 %v467
      %v1190 = vpop.f32.mrf.mxu0
      %v1191 = vadd.f32 %v1134, %v1190
      %v1192 = vpop.f32.mrf.mxu0
      %v1193 = vpop.f32.mrf.mxu0
      %v1194 = vadd.f32 %v1137, %v1193
      %v1195 = vpop.f32.mrf.mxu0
      %1196 = vmatprep.mubr.bf16.mxu0 %v479
      %1197 = vmatmul.mubr.bf16.gmra.mxu0 %v468
      %v1198 = vpop.f32.mrf.mxu0
      %v1199 = vadd.f32 %v1142, %v1198
      %v1200 = vpop.f32.mrf.mxu0
      %v1201 = vpop.f32.mrf.mxu0
      %v1202 = vadd.f32 %v1145, %v1201
      %v1203 = vpop.f32.mrf.mxu0
      %1204 = vdwg.mxu0
      %1205 = vmatprep.subr.bf16.mxu0 0
      %1206 = vmatpush1.bf16.msra.mxu0 %v986
      %1207 = vmatprep.subr.bf16.mxu0 0
      %1208 = vmatpush1.bf16.msra.mxu0 %v985
      %1209 = vmatprep.subr.bf16.mxu0 0
      %1210 = vmatpush1.bf16.msra.mxu0 %v984
      %1211 = vmatprep.subr.bf16.mxu0 0
      %1212 = vmatpush1.bf16.msra.mxu0 %v983
      %1213 = vmatprep.subr.bf16.mxu0 0
      %1214 = vmatpush1.bf16.msra.mxu0 %v982
      %1215 = vmatprep.subr.bf16.mxu0 0
      %1216 = vmatpush1.bf16.msra.mxu0 %v981
      %1217 = vmatprep.subr.bf16.mxu0 0
      %1218 = vmatpush1.bf16.msra.mxu0 %v980
      %1219 = vmatprep.subr.bf16.mxu0 0
      %1220 = vmatpush1.bf16.msra.mxu0 %v979
      %1221 = vmatprep.subr.bf16.mxu0 0
      %1222 = vmatpush2.bf16.msra.mxu0 %v994
      %1223 = vmatprep.subr.bf16.mxu0 0
      %1224 = vmatpush2.bf16.msra.mxu0 %v993
      %1225 = vmatprep.subr.bf16.mxu0 0
      %1226 = vmatpush2.bf16.msra.mxu0 %v992
      %1227 = vmatprep.subr.bf16.mxu0 0
      %1228 = vmatpush2.bf16.msra.mxu0 %v991
      %1229 = vmatprep.subr.bf16.mxu0 0
      %1230 = vmatpush2.bf16.msra.mxu0 %v990
      %1231 = vmatprep.subr.bf16.mxu0 0
      %1232 = vmatpush2.bf16.msra.mxu0 %v989
      %1233 = vmatprep.subr.bf16.mxu0 0
      %1234 = vmatpush2.bf16.msra.mxu0 %v988
      %1235 = vmatprep.subr.bf16.mxu0 0
      %1236 = vmatpush2.bf16.msra.mxu0 %v987
      %1237 = vmatprep.mubr.bf16.mxu0 %v491
      %1238 = vmatmul.mubr.bf16.gmra.mxu0 %v480
      %v1239 = vpop.f32.mrf.mxu0
      %v1240 = vadd.f32 %v1183, %v1239
      %v1241 = vpop.f32.mrf.mxu0
      %v1242 = vpop.f32.mrf.mxu0
      %v1243 = vadd.f32 %v1186, %v1242
      %v1244 = vpop.f32.mrf.mxu0
      %1245 = vmatprep.mubr.bf16.mxu0 %v492
      %1246 = vmatmul.mubr.bf16.gmra.mxu0 %v481
      %v1247 = vpop.f32.mrf.mxu0
      %v1248 = vadd.f32 %v1191, %v1247
      %v1249 = vpop.f32.mrf.mxu0
      %v1250 = vpop.f32.mrf.mxu0
      %v1251 = vadd.f32 %v1194, %v1250
      %v1252 = vpop.f32.mrf.mxu0
      %1253 = vmatprep.mubr.bf16.mxu0 %v493
      %1254 = vmatmul.mubr.bf16.gmra.mxu0 %v482
      %v1255 = vpop.f32.mrf.mxu0
      %v1256 = vadd.f32 %v1199, %v1255
      %v1257 = vpop.f32.mrf.mxu0
      %v1258 = vpop.f32.mrf.mxu0
      %v1259 = vadd.f32 %v1202, %v1258
      %v1260 = vpop.f32.mrf.mxu0
      %1261 = vdwg.mxu0
      %1262 = vmatprep.subr.bf16.mxu0 0
      %1263 = vmatpush1.bf16.msra.mxu0 %v1002
      %1264 = vmatprep.subr.bf16.mxu0 0
      %1265 = vmatpush1.bf16.msra.mxu0 %v1001
      %1266 = vmatprep.subr.bf16.mxu0 0
      %1267 = vmatpush1.bf16.msra.mxu0 %v1000
      %1268 = vmatprep.subr.bf16.mxu0 0
      %1269 = vmatpush1.bf16.msra.mxu0 %v999
      %1270 = vmatprep.subr.bf16.mxu0 0
      %1271 = vmatpush1.bf16.msra.mxu0 %v998
      %1272 = vmatprep.subr.bf16.mxu0 0
      %1273 = vmatpush1.bf16.msra.mxu0 %v997
      %1274 = vmatprep.subr.bf16.mxu0 0
      %1275 = vmatpush1.bf16.msra.mxu0 %v996
      %1276 = vmatprep.subr.bf16.mxu0 0
      %1277 = vmatpush1.bf16.msra.mxu0 %v995
      %1278 = vmatprep.subr.bf16.mxu0 0
      %1279 = vmatpush2.bf16.msra.mxu0 %v1010
      %1280 = vmatprep.subr.bf16.mxu0 0
      %1281 = vmatpush2.bf16.msra.mxu0 %v1009
      %1282 = vmatprep.subr.bf16.mxu0 0
      %1283 = vmatpush2.bf16.msra.mxu0 %v1008
      %1284 = vmatprep.subr.bf16.mxu0 0
      %1285 = vmatpush2.bf16.msra.mxu0 %v1007
      %1286 = vmatprep.subr.bf16.mxu0 0
      %1287 = vmatpush2.bf16.msra.mxu0 %v1006
      %1288 = vmatprep.subr.bf16.mxu0 0
      %1289 = vmatpush2.bf16.msra.mxu0 %v1005
      %1290 = vmatprep.subr.bf16.mxu0 0
      %1291 = vmatpush2.bf16.msra.mxu0 %v1004
      %1292 = vmatprep.subr.bf16.mxu0 0
      %1293 = vmatpush2.bf16.msra.mxu0 %v1003
      %1294 = vmatprep.mubr.bf16.mxu0 %v432
      %1295 = vmatmul.mubr.bf16.gmra.mxu0 %v501
      %v1296 = vpop.f32.mrf.mxu0
      %v1297 = vadd.f32 %v1240, %v1296
      %v1298 = vpop.f32.mrf.mxu0
      %v1299 = vpop.f32.mrf.mxu0
      %v1300 = vadd.f32 %v1243, %v1299
      %v1301 = vpop.f32.mrf.mxu0
      %1302 = vmatprep.mubr.bf16.mxu0 %v433
      %1303 = vmatmul.mubr.bf16.gmra.mxu0 %v502
      %v1304 = vpop.f32.mrf.mxu0
      %v1305 = vadd.f32 %v1248, %v1304
      %v1306 = vpop.f32.mrf.mxu0
      %v1307 = vpop.f32.mrf.mxu0
      %v1308 = vadd.f32 %v1251, %v1307
      %v1309 = vpop.f32.mrf.mxu0
      %1310 = vmatprep.mubr.bf16.mxu0 %v504
      %1311 = vmatmul.mubr.bf16.gmra.mxu0 %v503
      %v1312 = vpop.f32.mrf.mxu0
      %v1313 = vadd.f32 %v1256, %v1312
      %v1314 = vpop.f32.mrf.mxu0
      %v1315 = vpop.f32.mrf.mxu0
      %v1316 = vadd.f32 %v1259, %v1315
      %v1317 = vpop.f32.mrf.mxu0
      %1318 = vdwg.mxu0
      %1319 = vmatprep.subr.bf16.mxu0 0
      %1320 = vmatpush1.bf16.msra.mxu0 %v1018
      %1321 = vmatprep.subr.bf16.mxu0 0
      %1322 = vmatpush1.bf16.msra.mxu0 %v1017
      %1323 = vmatprep.subr.bf16.mxu0 0
      %1324 = vmatpush1.bf16.msra.mxu0 %v1016
      %1325 = vmatprep.subr.bf16.mxu0 0
      %1326 = vmatpush1.bf16.msra.mxu0 %v1015
      %1327 = vmatprep.subr.bf16.mxu0 0
      %1328 = vmatpush1.bf16.msra.mxu0 %v1014
      %1329 = vmatprep.subr.bf16.mxu0 0
      %1330 = vmatpush1.bf16.msra.mxu0 %v1013
      %1331 = vmatprep.subr.bf16.mxu0 0
      %1332 = vmatpush1.bf16.msra.mxu0 %v1012
      %1333 = vmatprep.subr.bf16.mxu0 0
      %1334 = vmatpush1.bf16.msra.mxu0 %v1011
      %1335 = vmatprep.subr.bf16.mxu0 0
      %1336 = vmatpush2.bf16.msra.mxu0 0
      %1337 = vmatprep.subr.bf16.mxu0 0
      %1338 = vmatpush2.bf16.msra.mxu0 0
      %1339 = vmatprep.subr.bf16.mxu0 0
      %1340 = vmatpush2.bf16.msra.mxu0 0
      %1341 = vmatprep.subr.bf16.mxu0 0
      %1342 = vmatpush2.bf16.msra.mxu0 0
      %1343 = vmatprep.subr.bf16.mxu0 0
      %1344 = vmatpush2.bf16.msra.mxu0 0
      %1345 = vmatprep.subr.bf16.mxu0 0
      %1346 = vmatpush2.bf16.msra.mxu0 0
      %1347 = vmatprep.subr.bf16.mxu0 0
      %1348 = vmatpush2.bf16.msra.mxu0 0
      %1349 = vmatprep.subr.bf16.mxu0 0
      %1350 = vmatpush2.bf16.msra.mxu0 0
      %1351 = vmatprep.mubr.bf16.mxu0 0
      %1352 = vmatmul.mubr.bf16.gmra.mxu0 %v512
      %v1353 = vpop.f32.mrf.mxu0
      %v1354 = vadd.f32 %v1297, %v1353
      %v1355 = vpop.f32.mrf.mxu0
      %v1356 = vpop.f32.mrf.mxu0
      %v1357 = vadd.f32 %v1300, %v1356
      %v1358 = vpop.f32.mrf.mxu0
      %1359 = vmatprep.mubr.bf16.mxu0 0
      %1360 = vmatmul.mubr.bf16.gmra.mxu0 %v513
      %v1361 = vpop.f32.mrf.mxu0
      %v1362 = vadd.f32 %v1305, %v1361
      %v1363 = vpop.f32.mrf.mxu0
      %v1364 = vpop.f32.mrf.mxu0
      %v1365 = vadd.f32 %v1308, %v1364
      %v1366 = vpop.f32.mrf.mxu0
      %1367 = vmatprep.mubr.bf16.mxu0 0
      %1368 = vmatmul.mubr.bf16.gmra.mxu0 %v514
      %v1369 = vpop.f32.mrf.mxu0
      %v1370 = vadd.f32 %v1313, %v1369
      %v1371 = vpop.f32.mrf.mxu0
      %v1372 = vpop.f32.mrf.mxu0
      %v1373 = vadd.f32 %v1316, %v1372
      %v1374 = vpop.f32.mrf.mxu0
      %1375 = vdwg.mxu0
      %v1376 = vld [vmem:[%s2] sm:$0x1]
      %v1378 = vlaneseq
      %v1379 = vshrl.u32 %v1378, 7
      %v1380 = vsub.s32 0, %v1379
      %v1381 = vrot.slane %v1376, %v1380
      %v1383 = vmul.f32 %v1354, %v1381
      %v1384 = vmul.f32 %v1357, %v1381
      %v1385 = vmul.f32 %v1362, %v1381
      %v1386 = vmul.f32 %v1365, %v1381
      %v1387 = vmul.f32 %v1370, %v1381
      %v1388 = vmul.f32 %v1373, %v1381
      %v1389 = vld [vmem:[%s3] sm:$0x1]
      %v1391 = vlaneseq
      %v1392 = vshrl.u32 %v1391, 7
      %v1393 = vsub.s32 0, %v1392
      %v1394 = vrot.slane %v1389, %v1393
      %v1396 = vadd.f32 %v1383, %v1394
      %v1397 = vadd.f32 %v1384, %v1394
      %v1398 = vadd.f32 %v1385, %v1394
      %v1399 = vadd.f32 %v1386, %v1394
      %v1400 = vadd.f32 %v1387, %v1394
      %v1401 = vadd.f32 %v1388, %v1394
      %v1402 = vmax.f32 %v1396, 0.0
      %v1403 = vmax.f32 %v1397, 0.0
      %v1404 = vmax.f32 %v1398, 0.0
      %v1405 = vmax.f32 %v1399, 0.0
      %v1406 = vmax.f32 %v1400, 0.0
      %v1407 = vmax.f32 %v1401, 0.0
      %v1408 = vshra.s32 %v372, 3
      %v1409 = vshra.s32 %v373, 3
      %v1410 = vshra.s32 %v374, 3
      %v1411 = vshra.s32 %v375, 3
      %v1412 = vstv %s303
      %v1413 = vadd.s32 %v1408, %v1412
      %v1414 = vadd.s32 %v1409, %v1412
      %v1415 = vadd.s32 %v1410, %v1412
      %v1416 = vadd.s32 %v1411, %v1412
      %vm1417 = vcmp.ge.s32.totalorder %v1413, 1
      %vm1418 = vcmp.ge.s32.totalorder %v1414, 1
      %vm1419 = vcmp.ge.s32.totalorder %v1415, 1
      %vm1420 = vcmp.ge.s32.totalorder %v1416, 1
      %vm1421 = vcmp.le.s32.totalorder %v1413, 6
      %vm1422 = vcmp.le.s32.totalorder %v1414, 6
      %vm1423 = vcmp.le.s32.totalorder %v1415, 6
      %vm1424 = vcmp.le.s32.totalorder %v1416, 6
      %v1425 = vrot.slane %v1402, 7
      %v1426 = vrot.slane %v1403, 7
      %v1427 = vrot.slane %v1404, 7
      %v1428 = vrot.slane %v1405, 7
      %v1429 = vrot.slane %v1407, 7
      %v1430 = vsel %vm403, %v1427, %v1428
      %v1431 = vsel %vm403, %v1426, %v1427
      %v1432 = vsel %vm403, %v1425, %v1426
      %v1433 = vsel %vm403, %v1429, %v1425
      %vm1434 = vmand %vm384, %vm1417
      %vm1435 = vmand %vm385, %vm1418
      %vm1436 = vmand %vm386, %vm1419
      %vm1437 = vmand %vm387, %vm1420
      %v1438 = vsel %vm1434, 1, 0
      %v1439 = vsel %vm1435, 1, 0
      %v1440 = vsel %vm1436, 1, 0
      %v1441 = vsel %vm1437, 1, 0
      %vm1442 = vcmp.eq.s32.totalorder %v1438, 1
      %vm1443 = vcmp.eq.s32.totalorder %v1439, 1
      %vm1444 = vcmp.eq.s32.totalorder %v1440, 1
      %vm1445 = vcmp.eq.s32.totalorder %v1441, 1
      %v1446 = vsel %vm1442, %v1433, 0.0
      %v1447 = vsel %vm1443, %v1432, 0.0
      %v1448 = vsel %vm1444, %v1431, 0.0
      %v1449 = vsel %vm1445, %v1430, 0.0
      %v1450 = vpack.c.bf16 %v1447, %v1446
      %v1451 = vpack.c.bf16 %v1449, %v1448
      %v1452 = vsel %vm1417, 1, 0
      %v1453 = vsel %vm1418, 1, 0
      %v1454 = vsel %vm1419, 1, 0
      %v1455 = vsel %vm1420, 1, 0
      %vm1456 = vcmp.eq.s32.totalorder %v1452, 1
      %vm1457 = vcmp.eq.s32.totalorder %v1453, 1
      %vm1458 = vcmp.eq.s32.totalorder %v1454, 1
      %vm1459 = vcmp.eq.s32.totalorder %v1455, 1
      %v1460 = vsel %vm1456, %v1402, 0.0
      %v1461 = vsel %vm1457, %v1403, 0.0
      %v1462 = vsel %vm1458, %v1404, 0.0
      %v1463 = vsel %vm1459, %v1405, 0.0
      %v1464 = vpack.c.bf16 %v1461, %v1460
      %v1465 = vpack.c.bf16 %v1463, %v1462
      %v1466 = vrot.slane %v1402, 1
      %v1467 = vrot.slane %v1403, 1
      %v1468 = vrot.slane %v1404, 1
      %v1469 = vrot.slane %v1405, 1
      %v1470 = vrot.slane %v1406, 1
      %v1471 = vsel %vm441, %v1469, %v1470
      %v1472 = vsel %vm441, %v1468, %v1469
      %v1473 = vsel %vm441, %v1467, %v1468
      %v1474 = vsel %vm441, %v1466, %v1467
      %vm1475 = vmand %vm390, %vm1417
      %vm1476 = vmand %vm391, %vm1418
      %vm1477 = vmand %vm392, %vm1419
      %vm1478 = vmand %vm393, %vm1420
      %v1479 = vsel %vm1475, 1, 0
      %v1480 = vsel %vm1476, 1, 0
      %v1481 = vsel %vm1477, 1, 0
      %v1482 = vsel %vm1478, 1, 0
      %vm1483 = vcmp.eq.s32.totalorder %v1479, 1
      %vm1484 = vcmp.eq.s32.totalorder %v1480, 1
      %vm1485 = vcmp.eq.s32.totalorder %v1481, 1
      %vm1486 = vcmp.eq.s32.totalorder %v1482, 1
      %v1487 = vsel %vm1483, %v1474, 0.0
      %v1488 = vsel %vm1484, %v1473, 0.0
      %v1489 = vsel %vm1485, %v1472, 0.0
      %v1490 = vsel %vm1486, %v1471, 0.0
      %v1491 = vpack.c.bf16 %v1488, %v1487
      %v1492 = vpack.c.bf16 %v1490, %v1489
      %v1493 = vrot.slane %v1406, 7
      %v1494 = vsel %vm403, %v1428, %v1493
      %v1495 = vsel %vm416, %v1432, 0.0
      %v1496 = vsel %vm417, %v1431, 0.0
      %v1497 = vsel %vm418, %v1430, 0.0
      %v1498 = vsel %vm419, %v1494, 0.0
      %v1499 = vpack.c.bf16 %v1496, %v1495
      %v1500 = vpack.c.bf16 %v1498, %v1497
      %v1501 = vpack.c.bf16 %v1404, %v1403
      %v1502 = vpack.c.bf16 %v1406, %v1405
      %v1503 = vrot.slane %v1407, 1
      %v1504 = vsel %vm441, %v1470, %v1503
      %v1505 = vsel %vm454, %v1473, 0.0
      %v1506 = vsel %vm455, %v1472, 0.0
      %v1507 = vsel %vm456, %v1471, 0.0
      %v1508 = vsel %vm457, %v1504, 0.0
      %v1509 = vpack.c.bf16 %v1506, %v1505
      %v1510 = vpack.c.bf16 %v1508, %v1507
      %v1511 = vsel %vm403, %v1493, %v1429
      %vm1512 = vmand %vm384, %vm1421
      %vm1513 = vmand %vm385, %vm1422
      %vm1514 = vmand %vm386, %vm1423
      %vm1515 = vmand %vm387, %vm1424
      %v1516 = vsel %vm1512, 1, 0
      %v1517 = vsel %vm1513, 1, 0
      %v1518 = vsel %vm1514, 1, 0
      %v1519 = vsel %vm1515, 1, 0
      %vm1520 = vcmp.eq.s32.totalorder %v1516, 1
      %vm1521 = vcmp.eq.s32.totalorder %v1517, 1
      %vm1522 = vcmp.eq.s32.totalorder %v1518, 1
      %vm1523 = vcmp.eq.s32.totalorder %v1519, 1
      %v1524 = vsel %vm1520, %v1431, 0.0
      %v1525 = vsel %vm1521, %v1430, 0.0
      %v1526 = vsel %vm1522, %v1494, 0.0
      %v1527 = vsel %vm1523, %v1511, 0.0
      %v1528 = vpack.c.bf16 %v1525, %v1524
      %v1529 = vpack.c.bf16 %v1527, %v1526
      %v1530 = vsel %vm1421, 1, 0
      %v1531 = vsel %vm1422, 1, 0
      %v1532 = vsel %vm1423, 1, 0
      %v1533 = vsel %vm1424, 1, 0
      %vm1534 = vcmp.eq.s32.totalorder %v1530, 1
      %vm1535 = vcmp.eq.s32.totalorder %v1531, 1
      %vm1536 = vcmp.eq.s32.totalorder %v1532, 1
      %vm1537 = vcmp.eq.s32.totalorder %v1533, 1
      %v1538 = vsel %vm1534, %v1404, 0.0
      %v1539 = vsel %vm1535, %v1405, 0.0
      %v1540 = vsel %vm1536, %v1406, 0.0
      %v1541 = vsel %vm1537, %v1407, 0.0
      %v1542 = vpack.c.bf16 %v1539, %v1538
      %v1543 = vpack.c.bf16 %v1541, %v1540
      %v1544 = vsel %vm441, %v1503, %v1466
      %vm1545 = vmand %vm390, %vm1421
      %vm1546 = vmand %vm391, %vm1422
      %vm1547 = vmand %vm392, %vm1423
      %vm1548 = vmand %vm393, %vm1424
      %v1549 = vsel %vm1545, 1, 0
      %v1550 = vsel %vm1546, 1, 0
      %v1551 = vsel %vm1547, 1, 0
      %v1552 = vsel %vm1548, 1, 0
      %vm1553 = vcmp.eq.s32.totalorder %v1549, 1
      %vm1554 = vcmp.eq.s32.totalorder %v1550, 1
      %vm1555 = vcmp.eq.s32.totalorder %v1551, 1
      %vm1556 = vcmp.eq.s32.totalorder %v1552, 1
      %v1557 = vsel %vm1553, %v1472, 0.0
      %v1558 = vsel %vm1554, %v1471, 0.0
      %v1559 = vsel %vm1555, %v1504, 0.0
      %v1560 = vsel %vm1556, %v1544, 0.0
      %v1561 = vpack.c.bf16 %v1558, %v1557
      %v1562 = vpack.c.bf16 %v1560, %v1559
      %v1563 = vld [vmem:[%s4] sm:$0xf]
      %v1564 = vld [vmem:[%s4 + $0x4] sm:$0xf]
      %v1565 = vld [vmem:[%s4 + $0x8] sm:$0xf]
      %v1566 = vld [vmem:[%s4 + $0xc] sm:$0xf]
      %v1567 = vld [vmem:[%s4 + $0x10] sm:$0xf]
      %v1568 = vld [vmem:[%s4 + $0x14] sm:$0xf]
      %v1569 = vld [vmem:[%s4 + $0x18] sm:$0xf]
      %v1570 = vld [vmem:[%s4 + $0x1c] sm:$0xf]
      %v1571 = vld [vmem:[%s4 + $0x20] sm:$0xf]
      %v1572 = vld [vmem:[%s4 + $0x24] sm:$0xf]
      %v1573 = vld [vmem:[%s4 + $0x28] sm:$0xf]
      %v1574 = vld [vmem:[%s4 + $0x2c] sm:$0xf]
      %v1575 = vld [vmem:[%s4 + $0x30] sm:$0xf]
      %v1576 = vld [vmem:[%s4 + $0x34] sm:$0xf]
      %v1577 = vld [vmem:[%s4 + $0x38] sm:$0xf]
      %v1578 = vld [vmem:[%s4 + $0x3c] sm:$0xf]
      %v1579 = vld [vmem:[%s4 + $0x40] sm:$0xf]
      %v1580 = vld [vmem:[%s4 + $0x44] sm:$0xf]
      %v1581 = vld [vmem:[%s4 + $0x48] sm:$0xf]
      %v1582 = vld [vmem:[%s4 + $0x4c] sm:$0xf]
      %v1583 = vld [vmem:[%s4 + $0x50] sm:$0xf]
      %v1584 = vld [vmem:[%s4 + $0x54] sm:$0xf]
      %v1585 = vld [vmem:[%s4 + $0x58] sm:$0xf]
      %v1586 = vld [vmem:[%s4 + $0x5c] sm:$0xf]
      %v1587 = vld [vmem:[%s4 + $0x60] sm:$0xf]
      %v1588 = vld [vmem:[%s4 + $0x64] sm:$0xf]
      %v1589 = vld [vmem:[%s4 + $0x68] sm:$0xf]
      %v1590 = vld [vmem:[%s4 + $0x6c] sm:$0xf]
      %v1591 = vld [vmem:[%s4 + $0x70] sm:$0xf]
      %v1592 = vld [vmem:[%s4 + $0x74] sm:$0xf]
      %v1593 = vld [vmem:[%s4 + $0x78] sm:$0xf]
      %v1594 = vld [vmem:[%s4 + $0x7c] sm:$0xf]
      %v1595 = vld [vmem:[%s4 + $0x80] sm:$0xf]
      %v1596 = vld [vmem:[%s4 + $0x84] sm:$0xf]
      %v1597 = vld [vmem:[%s4 + $0x88] sm:$0xf]
      %v1598 = vld [vmem:[%s4 + $0x8c] sm:$0xf]
      %v1599 = vld [vmem:[%s4 + $0x90] sm:$0xf]
      %v1600 = vld [vmem:[%s4 + $0x94] sm:$0xf]
      %v1601 = vld [vmem:[%s4 + $0x98] sm:$0xf]
      %v1602 = vld [vmem:[%s4 + $0x9c] sm:$0xf]
      %v1603 = vld [vmem:[%s4 + $0xa0] sm:$0xf]
      %v1604 = vld [vmem:[%s4 + $0xa4] sm:$0xf]
      %v1605 = vld [vmem:[%s4 + $0xa8] sm:$0xf]
      %v1606 = vld [vmem:[%s4 + $0xac] sm:$0xf]
      %v1607 = vld [vmem:[%s4 + $0xb0] sm:$0xf]
      %v1608 = vld [vmem:[%s4 + $0xb4] sm:$0xf]
      %v1609 = vld [vmem:[%s4 + $0xb8] sm:$0xf]
      %v1610 = vld [vmem:[%s4 + $0xbc] sm:$0xf]
      %v1611 = vld [vmem:[%s4 + $0xc0] sm:$0xf]
      %v1612 = vld [vmem:[%s4 + $0xc4] sm:$0xf]
      %v1613 = vld [vmem:[%s4 + $0xc8] sm:$0xf]
      %v1614 = vld [vmem:[%s4 + $0xcc] sm:$0xf]
      %v1615 = vld [vmem:[%s4 + $0xd0] sm:$0xf]
      %v1616 = vld [vmem:[%s4 + $0xd4] sm:$0xf]
      %v1617 = vld [vmem:[%s4 + $0xd8] sm:$0xf]
      %v1618 = vld [vmem:[%s4 + $0xdc] sm:$0xf]
      %v1619 = vld [vmem:[%s4 + $0xe0] sm:$0xf]
      %v1620 = vld [vmem:[%s4 + $0xe4] sm:$0xf]
      %v1621 = vld [vmem:[%s4 + $0xe8] sm:$0xf]
      %v1622 = vld [vmem:[%s4 + $0xec] sm:$0xf]
      %v1623 = vld [vmem:[%s4 + $0xf0] sm:$0xf]
      %v1624 = vld [vmem:[%s4 + $0xf4] sm:$0xf]
      %v1625 = vld [vmem:[%s4 + $0xf8] sm:$0xf]
      %v1626 = vld [vmem:[%s4 + $0xfc] sm:$0xf]
      %v1627 = vld [vmem:[%s4 + $0x100] sm:$0xf]
      %v1628 = vld [vmem:[%s4 + $0x104] sm:$0xf]
      %v1629 = vld [vmem:[%s4 + $0x108] sm:$0xf]
      %v1630 = vld [vmem:[%s4 + $0x10c] sm:$0xf]
      %v1631 = vld [vmem:[%s4 + $0x110] sm:$0xf]
      %v1632 = vld [vmem:[%s4 + $0x114] sm:$0xf]
      %v1633 = vld [vmem:[%s4 + $0x118] sm:$0xf]
      %v1634 = vld [vmem:[%s4 + $0x11c] sm:$0xf]
      %v1635 = vld [vmem:[%s4 + $0x120] sm:$0xf]
      %v1636 = vld [vmem:[%s4 + $0x124] sm:$0xf]
      %v1637 = vld [vmem:[%s4 + $0x128] sm:$0xf]
      %v1638 = vld [vmem:[%s4 + $0x12c] sm:$0xf]
      %v1639 = vld [vmem:[%s4 + $0x130] sm:$0xf]
      %v1640 = vld [vmem:[%s4 + $0x134] sm:$0xf]
      %v1641 = vld [vmem:[%s4 + $0x138] sm:$0xf]
      %v1642 = vld [vmem:[%s4 + $0x13c] sm:$0xf]
      %v1643 = vld [vmem:[%s4 + $0x140] sm:$0xf]
      %v1644 = vld [vmem:[%s4 + $0x144] sm:$0xf]
      %v1645 = vld [vmem:[%s4 + $0x148] sm:$0xf]
      %v1646 = vld [vmem:[%s4 + $0x14c] sm:$0xf]
      %v1647 = vld [vmem:[%s4 + $0x150] sm:$0xf]
      %v1648 = vld [vmem:[%s4 + $0x154] sm:$0xf]
      %v1649 = vld [vmem:[%s4 + $0x158] sm:$0xf]
      %v1650 = vld [vmem:[%s4 + $0x15c] sm:$0xf]
      %v1651 = vld [vmem:[%s4 + $0x160] sm:$0xf]
      %v1652 = vld [vmem:[%s4 + $0x164] sm:$0xf]
      %v1653 = vld [vmem:[%s4 + $0x168] sm:$0xf]
      %v1654 = vld [vmem:[%s4 + $0x16c] sm:$0xf]
      %v1655 = vld [vmem:[%s4 + $0x170] sm:$0xf]
      %v1656 = vld [vmem:[%s4 + $0x174] sm:$0xf]
      %v1657 = vld [vmem:[%s4 + $0x178] sm:$0xf]
      %v1658 = vld [vmem:[%s4 + $0x17c] sm:$0xf]
      %v1659 = vld [vmem:[%s4 + $0x180] sm:$0xf]
      %v1660 = vld [vmem:[%s4 + $0x184] sm:$0xf]
      %v1661 = vld [vmem:[%s4 + $0x188] sm:$0xf]
      %v1662 = vld [vmem:[%s4 + $0x18c] sm:$0xf]
      %v1663 = vld [vmem:[%s4 + $0x190] sm:$0xf]
      %v1664 = vld [vmem:[%s4 + $0x194] sm:$0xf]
      %v1665 = vld [vmem:[%s4 + $0x198] sm:$0xf]
      %v1666 = vld [vmem:[%s4 + $0x19c] sm:$0xf]
      %v1667 = vld [vmem:[%s4 + $0x1a0] sm:$0xf]
      %v1668 = vld [vmem:[%s4 + $0x1a4] sm:$0xf]
      %v1669 = vld [vmem:[%s4 + $0x1a8] sm:$0xf]
      %v1670 = vld [vmem:[%s4 + $0x1ac] sm:$0xf]
      %v1671 = vld [vmem:[%s4 + $0x1b0] sm:$0xf]
      %v1672 = vld [vmem:[%s4 + $0x1b4] sm:$0xf]
      %v1673 = vld [vmem:[%s4 + $0x1b8] sm:$0xf]
      %v1674 = vld [vmem:[%s4 + $0x1bc] sm:$0xf]
      %v1675 = vld [vmem:[%s4 + $0x1c0] sm:$0xf]
      %v1676 = vld [vmem:[%s4 + $0x1c4] sm:$0xf]
      %v1677 = vld [vmem:[%s4 + $0x1c8] sm:$0xf]
      %v1678 = vld [vmem:[%s4 + $0x1cc] sm:$0xf]
      %v1679 = vld [vmem:[%s4 + $0x1d0] sm:$0xf]
      %v1680 = vld [vmem:[%s4 + $0x1d4] sm:$0xf]
      %v1681 = vld [vmem:[%s4 + $0x1d8] sm:$0xf]
      %v1682 = vld [vmem:[%s4 + $0x1dc] sm:$0xf]
      %v1683 = vld [vmem:[%s4 + $0x1e0] sm:$0xf]
      %v1684 = vld [vmem:[%s4 + $0x1e4] sm:$0xf]
      %v1685 = vld [vmem:[%s4 + $0x1e8] sm:$0xf]
      %v1686 = vld [vmem:[%s4 + $0x1ec] sm:$0xf]
      %v1687 = vld [vmem:[%s4 + $0x1f0] sm:$0xf]
      %v1688 = vld [vmem:[%s4 + $0x1f4] sm:$0xf]
      %v1689 = vld [vmem:[%s4 + $0x1f8] sm:$0xf]
      %v1690 = vld [vmem:[%s4 + $0x1fc] sm:$0xf]
      %v1691 = vld [vmem:[%s4 + $0x200] sm:$0xf]
      %v1692 = vld [vmem:[%s4 + $0x204] sm:$0xf]
      %v1693 = vld [vmem:[%s4 + $0x208] sm:$0xf]
      %v1694 = vld [vmem:[%s4 + $0x20c] sm:$0xf]
      %v1695 = vld [vmem:[%s4 + $0x210] sm:$0xf]
      %v1696 = vld [vmem:[%s4 + $0x214] sm:$0xf]
      %v1697 = vld [vmem:[%s4 + $0x218] sm:$0xf]
      %v1698 = vld [vmem:[%s4 + $0x21c] sm:$0xf]
      %v1699 = vld [vmem:[%s4 + $0x220] sm:$0xf]
      %v1700 = vld [vmem:[%s4 + $0x224] sm:$0xf]
      %v1701 = vld [vmem:[%s4 + $0x228] sm:$0xf]
      %v1702 = vld [vmem:[%s4 + $0x22c] sm:$0xf]
      %v1703 = vld [vmem:[%s4 + $0x230] sm:$0xf]
      %v1704 = vld [vmem:[%s4 + $0x234] sm:$0xf]
      %v1705 = vld [vmem:[%s4 + $0x238] sm:$0xf]
      %v1706 = vld [vmem:[%s4 + $0x23c] sm:$0xf]
      %v1851 = vunpack.c.l.b16 %v1563
      %v1852 = vunpack.c.l.b16 %v1564
      %v1853 = vunpack.c.l.b16 %v1565
      %v1854 = vunpack.c.l.b16 %v1566
      %v1855 = vunpack.c.l.b16 %v1567
      %v1856 = vunpack.c.l.b16 %v1568
      %v1857 = vunpack.c.l.b16 %v1569
      %v1858 = vunpack.c.l.b16 %v1570
      %v1859 = vunpack.c.l.b16 %v1571
      %v1860 = vunpack.c.l.b16 %v1572
      %v1861 = vunpack.c.l.b16 %v1573
      %v1862 = vunpack.c.l.b16 %v1574
      %v1863 = vunpack.c.l.b16 %v1575
      %v1864 = vunpack.c.l.b16 %v1576
      %v1865 = vunpack.c.l.b16 %v1577
      %v1866 = vunpack.c.l.b16 %v1578
      %v1867 = vunpack.c.l.b16 %v1579
      %v1868 = vunpack.c.l.b16 %v1580
      %v1869 = vunpack.c.l.b16 %v1581
      %v1870 = vunpack.c.l.b16 %v1582
      %v1871 = vunpack.c.l.b16 %v1583
      %v1872 = vunpack.c.l.b16 %v1584
      %v1873 = vunpack.c.l.b16 %v1585
      %v1874 = vunpack.c.l.b16 %v1586
      %v1875 = vunpack.c.l.b16 %v1587
      %v1876 = vunpack.c.l.b16 %v1588
      %v1877 = vunpack.c.l.b16 %v1589
      %v1878 = vunpack.c.l.b16 %v1590
      %v1879 = vunpack.c.l.b16 %v1591
      %v1880 = vunpack.c.l.b16 %v1592
      %v1881 = vunpack.c.l.b16 %v1593
      %v1882 = vunpack.c.l.b16 %v1594
      %v1883 = vunpack.c.l.b16 %v1595
      %v1884 = vunpack.c.l.b16 %v1596
      %v1885 = vunpack.c.l.b16 %v1597
      %v1886 = vunpack.c.l.b16 %v1598
      %v1887 = vunpack.c.l.b16 %v1599
      %v1888 = vunpack.c.l.b16 %v1600
      %v1889 = vunpack.c.l.b16 %v1601
      %v1890 = vunpack.c.l.b16 %v1602
      %v1891 = vunpack.c.l.b16 %v1603
      %v1892 = vunpack.c.l.b16 %v1604
      %v1893 = vunpack.c.l.b16 %v1605
      %v1894 = vunpack.c.l.b16 %v1606
      %v1895 = vunpack.c.l.b16 %v1607
      %v1896 = vunpack.c.l.b16 %v1608
      %v1897 = vunpack.c.l.b16 %v1609
      %v1898 = vunpack.c.l.b16 %v1610
      %v1899 = vunpack.c.l.b16 %v1611
      %v1900 = vunpack.c.l.b16 %v1612
      %v1901 = vunpack.c.l.b16 %v1613
      %v1902 = vunpack.c.l.b16 %v1614
      %v1903 = vunpack.c.l.b16 %v1615
      %v1904 = vunpack.c.l.b16 %v1616
      %v1905 = vunpack.c.l.b16 %v1617
      %v1906 = vunpack.c.l.b16 %v1618
      %v1907 = vunpack.c.l.b16 %v1619
      %v1908 = vunpack.c.l.b16 %v1620
      %v1909 = vunpack.c.l.b16 %v1621
      %v1910 = vunpack.c.l.b16 %v1622
      %v1911 = vunpack.c.l.b16 %v1623
      %v1912 = vunpack.c.l.b16 %v1624
      %v1913 = vunpack.c.l.b16 %v1625
      %v1914 = vunpack.c.l.b16 %v1626
      %v1915 = vunpack.c.l.b16 %v1627
      %v1916 = vunpack.c.l.b16 %v1628
      %v1917 = vunpack.c.l.b16 %v1629
      %v1918 = vunpack.c.l.b16 %v1630
      %v1919 = vunpack.c.l.b16 %v1631
      %v1920 = vunpack.c.l.b16 %v1632
      %v1921 = vunpack.c.l.b16 %v1633
      %v1922 = vunpack.c.l.b16 %v1634
      %v1923 = vunpack.c.l.b16 %v1635
      %v1924 = vunpack.c.l.b16 %v1636
      %v1925 = vunpack.c.l.b16 %v1637
      %v1926 = vunpack.c.l.b16 %v1638
      %v1927 = vunpack.c.l.b16 %v1639
      %v1928 = vunpack.c.l.b16 %v1640
      %v1929 = vunpack.c.l.b16 %v1641
      %v1930 = vunpack.c.l.b16 %v1642
      %v1931 = vunpack.c.l.b16 %v1643
      %v1932 = vunpack.c.l.b16 %v1644
      %v1933 = vunpack.c.l.b16 %v1645
      %v1934 = vunpack.c.l.b16 %v1646
      %v1935 = vunpack.c.l.b16 %v1647
      %v1936 = vunpack.c.l.b16 %v1648
      %v1937 = vunpack.c.l.b16 %v1649
      %v1938 = vunpack.c.l.b16 %v1650
      %v1939 = vunpack.c.l.b16 %v1651
      %v1940 = vunpack.c.l.b16 %v1652
      %v1941 = vunpack.c.l.b16 %v1653
      %v1942 = vunpack.c.l.b16 %v1654
      %v1943 = vunpack.c.l.b16 %v1655
      %v1944 = vunpack.c.l.b16 %v1656
      %v1945 = vunpack.c.l.b16 %v1657
      %v1946 = vunpack.c.l.b16 %v1658
      %v1947 = vunpack.c.l.b16 %v1659
      %v1948 = vunpack.c.l.b16 %v1660
      %v1949 = vunpack.c.l.b16 %v1661
      %v1950 = vunpack.c.l.b16 %v1662
      %v1951 = vunpack.c.l.b16 %v1663
      %v1952 = vunpack.c.l.b16 %v1664
      %v1953 = vunpack.c.l.b16 %v1665
      %v1954 = vunpack.c.l.b16 %v1666
      %v1955 = vunpack.c.l.b16 %v1667
      %v1956 = vunpack.c.l.b16 %v1668
      %v1957 = vunpack.c.l.b16 %v1669
      %v1958 = vunpack.c.l.b16 %v1670
      %v1959 = vunpack.c.l.b16 %v1671
      %v1960 = vunpack.c.l.b16 %v1672
      %v1961 = vunpack.c.l.b16 %v1673
      %v1962 = vunpack.c.l.b16 %v1674
      %v1963 = vunpack.c.l.b16 %v1675
      %v1964 = vunpack.c.l.b16 %v1676
      %v1965 = vunpack.c.l.b16 %v1677
      %v1966 = vunpack.c.l.b16 %v1678
      %v1967 = vunpack.c.l.b16 %v1679
      %v1968 = vunpack.c.l.b16 %v1680
      %v1969 = vunpack.c.l.b16 %v1681
      %v1970 = vunpack.c.l.b16 %v1682
      %v1971 = vunpack.c.l.b16 %v1683
      %v1972 = vunpack.c.l.b16 %v1684
      %v1973 = vunpack.c.l.b16 %v1685
      %v1974 = vunpack.c.l.b16 %v1686
      %v1975 = vunpack.c.l.b16 %v1687
      %v1976 = vunpack.c.l.b16 %v1688
      %v1977 = vunpack.c.l.b16 %v1689
      %v1978 = vunpack.c.l.b16 %v1690
      %v1979 = vunpack.c.l.b16 %v1691
      %v1980 = vunpack.c.l.b16 %v1692
      %v1981 = vunpack.c.l.b16 %v1693
      %v1982 = vunpack.c.l.b16 %v1694
      %v1983 = vunpack.c.l.b16 %v1695
      %v1984 = vunpack.c.l.b16 %v1696
      %v1985 = vunpack.c.l.b16 %v1697
      %v1986 = vunpack.c.l.b16 %v1698
      %v1987 = vunpack.c.l.b16 %v1699
      %v1988 = vunpack.c.l.b16 %v1700
      %v1989 = vunpack.c.l.b16 %v1701
      %v1990 = vunpack.c.l.b16 %v1702
      %v1991 = vunpack.c.l.b16 %v1703
      %v1992 = vunpack.c.l.b16 %v1704
      %v1993 = vunpack.c.l.b16 %v1705
      %v1994 = vunpack.c.l.b16 %v1706
      %v1995 = vpack.c.b16 %v1852, %v1851
      %v1996 = vpack.c.b16 %v1854, %v1853
      %v1997 = vpack.c.b16 %v1856, %v1855
      %v1998 = vpack.c.b16 %v1858, %v1857
      %v1999 = vpack.c.b16 %v1860, %v1859
      %v2000 = vpack.c.b16 %v1862, %v1861
      %v2001 = vpack.c.b16 %v1864, %v1863
      %v2002 = vpack.c.b16 %v1866, %v1865
      %v2003 = vpack.c.b16 %v1868, %v1867
      %v2004 = vpack.c.b16 %v1870, %v1869
      %v2005 = vpack.c.b16 %v1872, %v1871
      %v2006 = vpack.c.b16 %v1874, %v1873
      %v2007 = vpack.c.b16 %v1876, %v1875
      %v2008 = vpack.c.b16 %v1878, %v1877
      %v2009 = vpack.c.b16 %v1880, %v1879
      %v2010 = vpack.c.b16 %v1882, %v1881
      %v2011 = vpack.c.b16 %v1884, %v1883
      %v2012 = vpack.c.b16 %v1886, %v1885
      %v2013 = vpack.c.b16 %v1888, %v1887
      %v2014 = vpack.c.b16 %v1890, %v1889
      %v2015 = vpack.c.b16 %v1892, %v1891
      %v2016 = vpack.c.b16 %v1894, %v1893
      %v2017 = vpack.c.b16 %v1896, %v1895
      %v2018 = vpack.c.b16 %v1898, %v1897
      %v2019 = vpack.c.b16 %v1900, %v1899
      %v2020 = vpack.c.b16 %v1902, %v1901
      %v2021 = vpack.c.b16 %v1904, %v1903
      %v2022 = vpack.c.b16 %v1906, %v1905
      %v2023 = vpack.c.b16 %v1908, %v1907
      %v2024 = vpack.c.b16 %v1910, %v1909
      %v2025 = vpack.c.b16 %v1912, %v1911
      %v2026 = vpack.c.b16 %v1914, %v1913
      %v2027 = vpack.c.b16 %v1916, %v1915
      %v2028 = vpack.c.b16 %v1918, %v1917
      %v2029 = vpack.c.b16 %v1920, %v1919
      %v2030 = vpack.c.b16 %v1922, %v1921
      %v2031 = vpack.c.b16 %v1924, %v1923
      %v2032 = vpack.c.b16 %v1926, %v1925
      %v2033 = vpack.c.b16 %v1928, %v1927
      %v2034 = vpack.c.b16 %v1930, %v1929
      %v2035 = vpack.c.b16 %v1932, %v1931
      %v2036 = vpack.c.b16 %v1934, %v1933
      %v2037 = vpack.c.b16 %v1936, %v1935
      %v2038 = vpack.c.b16 %v1938, %v1937
      %v2039 = vpack.c.b16 %v1940, %v1939
      %v2040 = vpack.c.b16 %v1942, %v1941
      %v2041 = vpack.c.b16 %v1944, %v1943
      %v2042 = vpack.c.b16 %v1946, %v1945
      %v2043 = vpack.c.b16 %v1948, %v1947
      %v2044 = vpack.c.b16 %v1950, %v1949
      %v2045 = vpack.c.b16 %v1952, %v1951
      %v2046 = vpack.c.b16 %v1954, %v1953
      %v2047 = vpack.c.b16 %v1956, %v1955
      %v2048 = vpack.c.b16 %v1958, %v1957
      %v2049 = vpack.c.b16 %v1960, %v1959
      %v2050 = vpack.c.b16 %v1962, %v1961
      %v2051 = vpack.c.b16 %v1964, %v1963
      %v2052 = vpack.c.b16 %v1966, %v1965
      %v2053 = vpack.c.b16 %v1968, %v1967
      %v2054 = vpack.c.b16 %v1970, %v1969
      %v2055 = vpack.c.b16 %v1972, %v1971
      %v2056 = vpack.c.b16 %v1974, %v1973
      %v2057 = vpack.c.b16 %v1976, %v1975
      %v2058 = vpack.c.b16 %v1978, %v1977
      %v2059 = vpack.c.b16 %v1980, %v1979
      %v2060 = vpack.c.b16 %v1982, %v1981
      %v2061 = vpack.c.b16 %v1984, %v1983
      %v2062 = vpack.c.b16 %v1986, %v1985
      %v2063 = vpack.c.b16 %v1988, %v1987
      %v2064 = vpack.c.b16 %v1990, %v1989
      %v2065 = vpack.c.b16 %v1992, %v1991
      %v2066 = vpack.c.b16 %v1994, %v1993
      %2139 = vmatprep.subr.bf16.mxu0 0
      %2140 = vmatpush1.bf16.msra.mxu0 %v2002
      %2141 = vmatprep.subr.bf16.mxu0 0
      %2142 = vmatpush1.bf16.msra.mxu0 %v2001
      %2143 = vmatprep.subr.bf16.mxu0 0
      %2144 = vmatpush1.bf16.msra.mxu0 %v2000
      %2145 = vmatprep.subr.bf16.mxu0 0
      %2146 = vmatpush1.bf16.msra.mxu0 %v1999
      %2147 = vmatprep.subr.bf16.mxu0 0
      %2148 = vmatpush1.bf16.msra.mxu0 %v1998
      %2149 = vmatprep.subr.bf16.mxu0 0
      %2150 = vmatpush1.bf16.msra.mxu0 %v1997
      %2151 = vmatprep.subr.bf16.mxu0 0
      %2152 = vmatpush1.bf16.msra.mxu0 %v1996
      %2153 = vmatprep.subr.bf16.mxu0 0
      %2154 = vmatpush1.bf16.msra.mxu0 %v1995
      %2155 = vmatprep.subr.bf16.mxu0 0
      %2156 = vmatpush2.bf16.msra.mxu0 %v2010
      %2157 = vmatprep.subr.bf16.mxu0 0
      %2158 = vmatpush2.bf16.msra.mxu0 %v2009
      %2159 = vmatprep.subr.bf16.mxu0 0
      %2160 = vmatpush2.bf16.msra.mxu0 %v2008
      %2161 = vmatprep.subr.bf16.mxu0 0
      %2162 = vmatpush2.bf16.msra.mxu0 %v2007
      %2163 = vmatprep.subr.bf16.mxu0 0
      %2164 = vmatpush2.bf16.msra.mxu0 %v2006
      %2165 = vmatprep.subr.bf16.mxu0 0
      %2166 = vmatpush2.bf16.msra.mxu0 %v2005
      %2167 = vmatprep.subr.bf16.mxu0 0
      %2168 = vmatpush2.bf16.msra.mxu0 %v2004
      %2169 = vmatprep.subr.bf16.mxu0 0
      %2170 = vmatpush2.bf16.msra.mxu0 %v2003
      %2171 = vmatprep.mubr.bf16.mxu0 %v1464
      %2172 = vmatmul.mubr.bf16.gmra.mxu0 %v1450
      %v2173 = vpop.f32.mrf.mxu0
      %v2174 = vadd.f32 0.0, %v2173
      %v2175 = vpop.f32.mrf.mxu0
      %v2176 = vpop.f32.mrf.mxu0
      %v2177 = vadd.f32 0.0, %v2176
      %v2178 = vpop.f32.mrf.mxu0
      %2179 = vmatprep.mubr.bf16.mxu0 %v1465
      %2180 = vmatmul.mubr.bf16.gmra.mxu0 %v1451
      %v2181 = vpop.f32.mrf.mxu0
      %v2182 = vadd.f32 0.0, %v2181
      %v2183 = vpop.f32.mrf.mxu0
      %v2184 = vpop.f32.mrf.mxu0
      %v2185 = vadd.f32 0.0, %v2184
      %v2186 = vpop.f32.mrf.mxu0
      %2187 = vdwg.mxu0
      %2188 = vmatprep.subr.bf16.mxu0 0
      %2189 = vmatpush1.bf16.msra.mxu0 %v2018
      %2190 = vmatprep.subr.bf16.mxu0 0
      %2191 = vmatpush1.bf16.msra.mxu0 %v2017
      %2192 = vmatprep.subr.bf16.mxu0 0
      %2193 = vmatpush1.bf16.msra.mxu0 %v2016
      %2194 = vmatprep.subr.bf16.mxu0 0
      %2195 = vmatpush1.bf16.msra.mxu0 %v2015
      %2196 = vmatprep.subr.bf16.mxu0 0
      %2197 = vmatpush1.bf16.msra.mxu0 %v2014
      %2198 = vmatprep.subr.bf16.mxu0 0
      %2199 = vmatpush1.bf16.msra.mxu0 %v2013
      %2200 = vmatprep.subr.bf16.mxu0 0
      %2201 = vmatpush1.bf16.msra.mxu0 %v2012
      %2202 = vmatprep.subr.bf16.mxu0 0
      %2203 = vmatpush1.bf16.msra.mxu0 %v2011
      %2204 = vmatprep.subr.bf16.mxu0 0
      %2205 = vmatpush2.bf16.msra.mxu0 %v2026
      %2206 = vmatprep.subr.bf16.mxu0 0
      %2207 = vmatpush2.bf16.msra.mxu0 %v2025
      %2208 = vmatprep.subr.bf16.mxu0 0
      %2209 = vmatpush2.bf16.msra.mxu0 %v2024
      %2210 = vmatprep.subr.bf16.mxu0 0
      %2211 = vmatpush2.bf16.msra.mxu0 %v2023
      %2212 = vmatprep.subr.bf16.mxu0 0
      %2213 = vmatpush2.bf16.msra.mxu0 %v2022
      %2214 = vmatprep.subr.bf16.mxu0 0
      %2215 = vmatpush2.bf16.msra.mxu0 %v2021
      %2216 = vmatprep.subr.bf16.mxu0 0
      %2217 = vmatpush2.bf16.msra.mxu0 %v2020
      %2218 = vmatprep.subr.bf16.mxu0 0
      %2219 = vmatpush2.bf16.msra.mxu0 %v2019
      %2220 = vmatprep.mubr.bf16.mxu0 %v1499
      %2221 = vmatmul.mubr.bf16.gmra.mxu0 %v1491
      %v2222 = vpop.f32.mrf.mxu0
      %v2223 = vadd.f32 %v2174, %v2222
      %v2224 = vpop.f32.mrf.mxu0
      %v2225 = vpop.f32.mrf.mxu0
      %v2226 = vadd.f32 %v2177, %v2225
      %v2227 = vpop.f32.mrf.mxu0
      %2228 = vmatprep.mubr.bf16.mxu0 %v1500
      %2229 = vmatmul.mubr.bf16.gmra.mxu0 %v1492
      %v2230 = vpop.f32.mrf.mxu0
      %v2231 = vadd.f32 %v2182, %v2230
      %v2232 = vpop.f32.mrf.mxu0
      %v2233 = vpop.f32.mrf.mxu0
      %v2234 = vadd.f32 %v2185, %v2233
      %v2235 = vpop.f32.mrf.mxu0
      %2236 = vdwg.mxu0
      %2237 = vmatprep.subr.bf16.mxu0 0
      %2238 = vmatpush1.bf16.msra.mxu0 %v2034
      %2239 = vmatprep.subr.bf16.mxu0 0
      %2240 = vmatpush1.bf16.msra.mxu0 %v2033
      %2241 = vmatprep.subr.bf16.mxu0 0
      %2242 = vmatpush1.bf16.msra.mxu0 %v2032
      %2243 = vmatprep.subr.bf16.mxu0 0
      %2244 = vmatpush1.bf16.msra.mxu0 %v2031
      %2245 = vmatprep.subr.bf16.mxu0 0
      %2246 = vmatpush1.bf16.msra.mxu0 %v2030
      %2247 = vmatprep.subr.bf16.mxu0 0
      %2248 = vmatpush1.bf16.msra.mxu0 %v2029
      %2249 = vmatprep.subr.bf16.mxu0 0
      %2250 = vmatpush1.bf16.msra.mxu0 %v2028
      %2251 = vmatprep.subr.bf16.mxu0 0
      %2252 = vmatpush1.bf16.msra.mxu0 %v2027
      %2253 = vmatprep.subr.bf16.mxu0 0
      %2254 = vmatpush2.bf16.msra.mxu0 %v2042
      %2255 = vmatprep.subr.bf16.mxu0 0
      %2256 = vmatpush2.bf16.msra.mxu0 %v2041
      %2257 = vmatprep.subr.bf16.mxu0 0
      %2258 = vmatpush2.bf16.msra.mxu0 %v2040
      %2259 = vmatprep.subr.bf16.mxu0 0
      %2260 = vmatpush2.bf16.msra.mxu0 %v2039
      %2261 = vmatprep.subr.bf16.mxu0 0
      %2262 = vmatpush2.bf16.msra.mxu0 %v2038
      %2263 = vmatprep.subr.bf16.mxu0 0
      %2264 = vmatpush2.bf16.msra.mxu0 %v2037
      %2265 = vmatprep.subr.bf16.mxu0 0
      %2266 = vmatpush2.bf16.msra.mxu0 %v2036
      %2267 = vmatprep.subr.bf16.mxu0 0
      %2268 = vmatpush2.bf16.msra.mxu0 %v2035
      %2269 = vmatprep.mubr.bf16.mxu0 %v1509
      %2270 = vmatmul.mubr.bf16.gmra.mxu0 %v1501
      %v2271 = vpop.f32.mrf.mxu0
      %v2272 = vadd.f32 %v2223, %v2271
      %v2273 = vpop.f32.mrf.mxu0
      %v2274 = vpop.f32.mrf.mxu0
      %v2275 = vadd.f32 %v2226, %v2274
      %v2276 = vpop.f32.mrf.mxu0
      %2277 = vmatprep.mubr.bf16.mxu0 %v1510
      %2278 = vmatmul.mubr.bf16.gmra.mxu0 %v1502
      %v2279 = vpop.f32.mrf.mxu0
      %v2280 = vadd.f32 %v2231, %v2279
      %v2281 = vpop.f32.mrf.mxu0
      %v2282 = vpop.f32.mrf.mxu0
      %v2283 = vadd.f32 %v2234, %v2282
      %v2284 = vpop.f32.mrf.mxu0
      %2285 = vdwg.mxu0
      %2286 = vmatprep.subr.bf16.mxu0 0
      %2287 = vmatpush1.bf16.msra.mxu0 %v2050
      %2288 = vmatprep.subr.bf16.mxu0 0
      %2289 = vmatpush1.bf16.msra.mxu0 %v2049
      %2290 = vmatprep.subr.bf16.mxu0 0
      %2291 = vmatpush1.bf16.msra.mxu0 %v2048
      %2292 = vmatprep.subr.bf16.mxu0 0
      %2293 = vmatpush1.bf16.msra.mxu0 %v2047
      %2294 = vmatprep.subr.bf16.mxu0 0
      %2295 = vmatpush1.bf16.msra.mxu0 %v2046
      %2296 = vmatprep.subr.bf16.mxu0 0
      %2297 = vmatpush1.bf16.msra.mxu0 %v2045
      %2298 = vmatprep.subr.bf16.mxu0 0
      %2299 = vmatpush1.bf16.msra.mxu0 %v2044
      %2300 = vmatprep.subr.bf16.mxu0 0
      %2301 = vmatpush1.bf16.msra.mxu0 %v2043
      %2302 = vmatprep.subr.bf16.mxu0 0
      %2303 = vmatpush2.bf16.msra.mxu0 %v2058
      %2304 = vmatprep.subr.bf16.mxu0 0
      %2305 = vmatpush2.bf16.msra.mxu0 %v2057
      %2306 = vmatprep.subr.bf16.mxu0 0
      %2307 = vmatpush2.bf16.msra.mxu0 %v2056
      %2308 = vmatprep.subr.bf16.mxu0 0
      %2309 = vmatpush2.bf16.msra.mxu0 %v2055
      %2310 = vmatprep.subr.bf16.mxu0 0
      %2311 = vmatpush2.bf16.msra.mxu0 %v2054
      %2312 = vmatprep.subr.bf16.mxu0 0
      %2313 = vmatpush2.bf16.msra.mxu0 %v2053
      %2314 = vmatprep.subr.bf16.mxu0 0
      %2315 = vmatpush2.bf16.msra.mxu0 %v2052
      %2316 = vmatprep.subr.bf16.mxu0 0
      %2317 = vmatpush2.bf16.msra.mxu0 %v2051
      %2318 = vmatprep.mubr.bf16.mxu0 %v1542
      %2319 = vmatmul.mubr.bf16.gmra.mxu0 %v1528
      %v2320 = vpop.f32.mrf.mxu0
      %v2321 = vadd.f32 %v2272, %v2320
      %v2322 = vpop.f32.mrf.mxu0
      %v2323 = vpop.f32.mrf.mxu0
      %v2324 = vadd.f32 %v2275, %v2323
      %v2325 = vpop.f32.mrf.mxu0
      %2326 = vmatprep.mubr.bf16.mxu0 %v1543
      %2327 = vmatmul.mubr.bf16.gmra.mxu0 %v1529
      %v2328 = vpop.f32.mrf.mxu0
      %v2329 = vadd.f32 %v2280, %v2328
      %v2330 = vpop.f32.mrf.mxu0
      %v2331 = vpop.f32.mrf.mxu0
      %v2332 = vadd.f32 %v2283, %v2331
      %v2333 = vpop.f32.mrf.mxu0
      %2334 = vdwg.mxu0
      %2335 = vmatprep.subr.bf16.mxu0 0
      %2336 = vmatpush1.bf16.msra.mxu0 %v2066
      %2337 = vmatprep.subr.bf16.mxu0 0
      %2338 = vmatpush1.bf16.msra.mxu0 %v2065
      %2339 = vmatprep.subr.bf16.mxu0 0
      %2340 = vmatpush1.bf16.msra.mxu0 %v2064
      %2341 = vmatprep.subr.bf16.mxu0 0
      %2342 = vmatpush1.bf16.msra.mxu0 %v2063
      %2343 = vmatprep.subr.bf16.mxu0 0
      %2344 = vmatpush1.bf16.msra.mxu0 %v2062
      %2345 = vmatprep.subr.bf16.mxu0 0
      %2346 = vmatpush1.bf16.msra.mxu0 %v2061
      %2347 = vmatprep.subr.bf16.mxu0 0
      %2348 = vmatpush1.bf16.msra.mxu0 %v2060
      %2349 = vmatprep.subr.bf16.mxu0 0
      %2350 = vmatpush1.bf16.msra.mxu0 %v2059
      %2351 = vmatprep.subr.bf16.mxu0 0
      %2352 = vmatpush2.bf16.msra.mxu0 0
      %2353 = vmatprep.subr.bf16.mxu0 0
      %2354 = vmatpush2.bf16.msra.mxu0 0
      %2355 = vmatprep.subr.bf16.mxu0 0
      %2356 = vmatpush2.bf16.msra.mxu0 0
      %2357 = vmatprep.subr.bf16.mxu0 0
      %2358 = vmatpush2.bf16.msra.mxu0 0
      %2359 = vmatprep.subr.bf16.mxu0 0
      %2360 = vmatpush2.bf16.msra.mxu0 0
      %2361 = vmatprep.subr.bf16.mxu0 0
      %2362 = vmatpush2.bf16.msra.mxu0 0
      %2363 = vmatprep.subr.bf16.mxu0 0
      %2364 = vmatpush2.bf16.msra.mxu0 0
      %2365 = vmatprep.subr.bf16.mxu0 0
      %2366 = vmatpush2.bf16.msra.mxu0 0
      %2367 = vmatprep.mubr.bf16.mxu0 0
      %2368 = vmatmul.mubr.bf16.gmra.mxu0 %v1561
      %v2369 = vpop.f32.mrf.mxu0
      %v2370 = vadd.f32 %v2321, %v2369
      %v2371 = vpop.f32.mrf.mxu0
      %v2372 = vpop.f32.mrf.mxu0
      %v2373 = vadd.f32 %v2324, %v2372
      %v2374 = vpop.f32.mrf.mxu0
      %2375 = vmatprep.mubr.bf16.mxu0 0
      %2376 = vmatmul.mubr.bf16.gmra.mxu0 %v1562
      %v2377 = vpop.f32.mrf.mxu0
      %v2378 = vadd.f32 %v2329, %v2377
      %v2379 = vpop.f32.mrf.mxu0
      %v2380 = vpop.f32.mrf.mxu0
      %v2381 = vadd.f32 %v2332, %v2380
      %v2382 = vpop.f32.mrf.mxu0
      %2383 = vdwg.mxu0
      %v2384 = vld [vmem:[%s5] sm:$0x1]
      %v2386 = vlaneseq
      %v2387 = vshrl.u32 %v2386, 7
      %v2388 = vsub.s32 0, %v2387
      %v2389 = vrot.slane %v2384, %v2388
      %v2391 = vmul.f32 %v2370, %v2389
      %v2392 = vmul.f32 %v2373, %v2389
      %v2393 = vmul.f32 %v2378, %v2389
      %v2394 = vmul.f32 %v2381, %v2389
      %v2395 = vld [vmem:[%s6] sm:$0x1]
      %v2397 = vlaneseq
      %v2398 = vshrl.u32 %v2397, 7
      %v2399 = vsub.s32 0, %v2398
      %v2400 = vrot.slane %v2395, %v2399
      %v2402 = vadd.f32 %v2391, %v2400
      %v2403 = vadd.f32 %v2392, %v2400
      %v2404 = vadd.f32 %v2393, %v2400
      %v2405 = vadd.f32 %v2394, %v2400
      %v2406 = vmax.f32 %v2402, 0.0
      %v2407 = vmax.f32 %v2403, 0.0
      %v2408 = vmax.f32 %v2404, 0.0
      %v2409 = vmax.f32 %v2405, 0.0
      %2410 = vst [vmem:[%s300] sm:$0xff] %v2406
      %2411 = vst [vmem:[%s300 + $0x8] sm:$0xff] %v2407
      %2412 = vst [vmem:[%s300 + $0x10] sm:$0xff] %v2408
      %2413 = vst [vmem:[%s300 + $0x18] sm:$0xff] %v2409
      %s2414 = smul.u32 4, %s23
      %p2415 = scmp.lt.s32.totalorder %s22, 1
      %s2416 = scalar_select %p2415, %s22, 1
      %p2417 = scmp.lt.s32.totalorder %s2414, 7
      %s2418 = scalar_select %p2417, %s2414, 7
      %s2419 = smul.addr %s2416, 8
      %s2420 = sadd.s32 %s2418, %s2419
      %s2421 = smul.addr %s2420, 8
      %s2422 = scalar_lea.vmem %s7, %s2421
      // Predicated region
      $region49: #{down_forward.1} parent=47 // pred_check
        %p2423 = pneg %p202
      $region50: #{down_forward.1} parent=47 // pred_check_branch
        %2425 = sbr.rel (%p2423) target = $region52
      $region51: #{down_forward.1} parent=47 // pred_region
        %s2426 = smul.u32 4, %s23
      $region52: #{down_forward.1} parent=47 // pred_fallthru
        _
    $region48: #{down_forward.1} parent=5 // pred_fallthru
      _
    %p2427 = scmp.le.s32.totalorder 2, %s13
    // Predicated region
    $region53: #{down_forward.1} parent=5 // pred_check
      %p2428 = pneg %p2427
    $region54: #{down_forward.1} parent=5 // pred_check_branch
      %2430 = sbr.rel (%p2428) target = $region56
    $region55: #{down_forward.1} parent=5 // pred_region
      %s2431 = ssub.s32 %s13, 2
      // Predicated region
      $region57: #{down_forward.1} parent=55 // pred_check
        %p2432 = pneg %p208
      $region58: #{down_forward.1} parent=55 // pred_check_branch
        %2434 = sbr.rel (%p2432) target = $region60
      $region59: #{down_forward.1} parent=55 // pred_region
        %s2435 = smul.u32 4, %s25
        %p2436 = scmp.lt.s32.totalorder %s24, 1
        %s2437 = scalar_select %p2436, %s24, 1
        %p2438 = scmp.lt.s32.totalorder %s2435, 7
        %s2439 = scalar_select %p2438, %s2435, 7
        %s2440 = smul.addr %s2437, 8
        %s2441 = sadd.s32 %s2439, %s2440
        %s2442 = smul.addr %s2441, 8
        %s2443 = scalar_lea.vmem %s7, %s2442
      $region60: #{down_forward.1} parent=55 // pred_fallthru
        _
    $region56: #{down_forward.1} parent=5 // pred_fallthru
      _
  $region6: #{down_forward.1} parent=0 // loop_footer
    %s17 = sadd.s32 1, %s13
  $region7: #{down_forward.1} parent=0 // loop_footer_branch
    %12 = sbr.rel target = $region3
  $region8: #{down_forward.1} parent=0 // loop_exit
    _

</llo_original>
